<compile_context>
chip_gen: v7x
topology: tpu7x:2x2x1
jax: 0.10.0
libtpu: 0.0.40
codegen_flags: <defaults>
</compile_context>

<pallas_src>
import functools

import jax
import jax.numpy as jnp
from jax.experimental import pallas as pl
from jax.experimental.pallas import tpu as pltpu

_SUBLANE = 8


def _round_up(v, m):
    return ((v + m - 1) // m) * m


def _vmem_budget_bytes():
    """~75% of physical VMEM (fallback: v7x's 64 MiB per-TC), capped at 96 MiB."""
    phys = 64 * 1024 * 1024
    try:
        info = pltpu.get_tpu_info()
        for attr in ("vmem_capacity_bytes", "vmem_bytes", "vmem_size_bytes"):
            val = getattr(info, attr, None)
            if val:
                phys = int(val)
                break
    except Exception:
        pass
    return int(min((phys * 3) // 4, 96 * 1024 * 1024))


def _num_tensorcores():
    """v7x has 2 TensorCores/chip; v5e/v6e have 1 (best-effort detection)."""
    try:
        kind = jax.devices()[0].device_kind.lower()
        if "v7" in kind:
            return 2
    except Exception:
        pass
    return 1


def _choose_row_tile(n_rows, tm_request, vmem_budget, n_cores):
    # Per-row VMEM cost: every (tm, <=128)-wide f32 block pads to 128 lanes
    # (512 B/row); double-buffered x + grid + out streams plus in-kernel f32
    # intermediates => budget ~5 KiB/row.
    bytes_per_row = 5 * 1024
    tm_cap = max(_SUBLANE, (vmem_budget // bytes_per_row) // _SUBLANE * _SUBLANE)
    tm = max(_SUBLANE, min(int(tm_request), tm_cap))
    tm = (tm // _SUBLANE) * _SUBLANE
    # Keep >= 2 "parallel" grid steps only on multi-TC chips (v7x); on v5e/v6e
    # halving the tile to manufacture 2 steps is pure per-step overhead.
    if n_cores > 1 and n_rows >= 256:
        tm = min(tm, _round_up(pl.cdiv(n_rows, 2), _SUBLANE))
    if n_rows <= tm:
        return n_rows  # single full-extent block (no 8-row alignment required)
    return tm


def _pointwise_regressor_kernel(
    x_ref,      # (TM, in_feat)          x rows
    g_ref,      # (TM, spacial_dim)      grid rows
    w1x_ref,    # (in_feat, hidden)      folded (W_fc[:in_feat] @ W_ff)
    w1g_ref,    # (spacial_dim, hidden)  folded (W_fc[in_feat:] @ W_ff)
    b1_ref,     # (1, hidden)            folded (b_fc @ W_ff + b_ff)
    wout_ref,   # (hidden, out_dim)
    bout_ref,   # (1, out_dim)
    o_ref,      # (TM, out_dim)
    *,
    spacial_dim,
):
    # Layer 1 (folded fc -> ff[0]): h = ReLU(x@W1x + g@W1g + b1)
    h = jnp.dot(x_ref[...], w1x_ref[...], preferred_element_type=jnp.float32)
    if spacial_dim <= 4:
        # A K=2 matmul still costs a full MXU weight push + tm/8 vmatmuls; do the
        # grid contribution as broadcast multiply-adds on the otherwise-idle VPU.
        g = g_ref[...]
        w1g = w1g_ref[...]
        for d in range(spacial_dim):
            h = h + g[:, d:d + 1] * w1g[d:d + 1, :]
    else:
        h = h + jnp.dot(g_ref[...], w1g_ref[...], preferred_element_type=jnp.float32)
    h = jnp.maximum(h + b1_ref[...], 0.0)

    # Dropout: identity at inference.
    # TODO(synk): training-mode dropout, num_layers > 1, and SiLU activation are
    # not implemented (default module config: 1 layer, ReLU, eval mode).

    # out: Linear(hidden -> out_dim)
    y = jnp.dot(h, wout_ref[...], preferred_element_type=jnp.float32) + bout_ref[...]
    o_ref[...] = y.astype(o_ref.dtype)


@functools.partial(jax.jit, static_argnames=("tm",))
def pointwise_regressor(x, grid, params, *, tm=4096):
    """x: (B, n, n, in_features) f32; grid: (B, n, n, spacial_dim) f32."""
    w_fc, b_fc, w_ff, b_ff, w_out, b_out = params

    B, n1, n2, in_feat = x.shape
    spacial_dim = grid.shape[-1]
    hidden = w_ff.shape[0]
    out_dim = w_out.shape[1]

    # Weights imported from PyTorch nn.Linear must be transposed to
    # (fan_in, fan_out) and preserve the [x, grid] concat order.
    assert w_fc.shape == (in_feat + spacial_dim, hidden), w_fc.shape
    assert w_ff.shape == (hidden, hidden), w_ff.shape
    assert w_out.shape == (hidden, out_dim), w_out.shape

    N = B * n1 * n2
    x_rows = x.reshape(N, in_feat)
    g_rows = grid.reshape(N, spacial_dim)
    # TODO(synk): if `grid` is known to be batch-broadcast, stream only the
    # (n1*n2, spacial_dim) base with a modulo index_map to cut its HBM reads by B.

    # fc -> ff[0] fold (valid: no activation after fc).  Done at HIGHEST
    # precision so the fold itself is f32-exact (pure re-association).
    hp = jax.lax.Precision.HIGHEST
    w1x = jnp.dot(w_fc[:in_feat], w_ff, precision=hp)         # (in_feat, hidden)
    w1g = jnp.dot(w_fc[in_feat:], w_ff, precision=hp)         # (spacial_dim, hidden)
    b1 = (jnp.dot(b_fc, w_ff, precision=hp) + b_ff).reshape(1, hidden)
    b_out_2d = b_out.reshape(1, out_dim)

    vmem_budget = _vmem_budget_bytes()
    tm_eff = _choose_row_tile(N, tm, vmem_budget, _num_tensorcores())

    n_main = (N // tm_eff) * tm_eff
    n_rem = N - n_main

    kernel = functools.partial(_pointwise_regressor_kernel, spacial_dim=spacial_dim)

    def run(xr, gr, rows, tile, steps):
        return pl.pallas_call(
            kernel,
            out_shape=jax.ShapeDtypeStruct((rows, out_dim), x.dtype),
            grid_spec=pltpu.PrefetchScalarGridSpec(
                num_scalar_prefetch=0,
                grid=(steps,),
                in_specs=[
                    pl.BlockSpec((tile, in_feat), lambda i: (i, 0)),       # x rows
                    pl.BlockSpec((tile, spacial_dim), lambda i: (i, 0)),   # grid rows
                    pl.BlockSpec((in_feat, hidden), lambda i: (0, 0)),     # W1x
                    pl.BlockSpec((spacial_dim, hidden), lambda i: (0, 0)), # W1g
                    pl.BlockSpec((1, hidden), lambda i: (0, 0)),           # b1
                    pl.BlockSpec((hidden, out_dim), lambda i: (0, 0)),     # W_out
                    pl.BlockSpec((1, out_dim), lambda i: (0, 0)),          # b_out
                ],
                out_specs=pl.BlockSpec((tile, out_dim), lambda i: (i, 0)),
            ),
            compiler_params=pltpu.CompilerParams(
                dimension_semantics=("parallel",),
                vmem_limit_bytes=vmem_budget,
            ),
        )(xr, gr, w1x, w1g, b1, w_out, b_out_2d)

    # Main pass: aligned tiles over the (untouched) full input arrays — no
    # jnp.pad, which used to cost a full extra HBM read+write of the inputs.
    y_rows = run(x_rows, g_rows, n_main, tm_eff, n_main // tm_eff)

    if n_rem > 0:
        # Ragged tail: one full-extent block over just the last n_rem rows
        # (only the small tail slice is copied, never the whole input).
        y_tail = run(x_rows[n_main:], g_rows[n_main:], n_rem, n_rem, 1)
        y_rows = jnp.concatenate([y_rows, y_tail], axis=0)

    return y_rows.reshape(B, n1, n2, out_dim)


def _reference(x, grid, params):
    w_fc, b_fc, w_ff, b_ff, w_out, b_out = params
    h = jnp.concatenate([x, grid], axis=-1) @ w_fc + b_fc
    h = jnp.maximum(h @ w_ff + b_ff, 0.0)
    return h @ w_out + b_out


def _make_inputs(key, B, n, in_feat, spacial_dim):
    x = jax.random.normal(key, (B, n, n, in_feat), dtype=jnp.float32)
    coords = jnp.linspace(0.0, 1.0, n)
    gx, gy = jnp.meshgrid(coords, coords, indexing="ij")
    grid = jnp.broadcast_to(
        jnp.stack([gx, gy], axis=-1)[None], (B, n, n, spacial_dim)
    ).astype(jnp.float32)
    return x, grid


if __name__ == "__main__":
    # Small-shape instantiation of PointwiseRegressor(
    #   in_dim=30, n_hidden=32, out_dim=5, num_layers=1,
    #   spacial_fc=True, spacial_dim=2, activation='relu')
    B, n, in_feat, spacial_dim = 2, 16, 30, 2
    n_hidden, out_dim = 32, 5
    in_dim = in_feat + spacial_dim

    key = jax.random.PRNGKey(0)
    k = jax.random.split(key, 9)

    def init_linear(kw, kb, fan_in, fan_out):
        bound = 1.0 / jnp.sqrt(fan_in)
        w = jax.random.uniform(kw, (fan_in, fan_out), jnp.float32, -bound, bound)
        b = jax.random.uniform(kb, (fan_out,), jnp.float32, -bound, bound)
        return w, b

    w_fc, b_fc = init_linear(k[1], k[2], in_dim, n_hidden)
    w_ff, b_ff = init_linear(k[3], k[4], n_hidden, n_hidden)
    w_out, b_out = init_linear(k[5], k[6], n_hidden, out_dim)
    params = (w_fc, b_fc, w_ff, b_ff, w_out, b_out)

    tol = dict(atol=2e-5, rtol=2e-5)

    # Test 1: "nice" shapes (N = 512 rows), single (or TC-split) tile.
    x, grid = _make_inputs(k[0], B, n, in_feat, spacial_dim)
    y = jax.block_until_ready(pointwise_regressor(x, grid, params))
    y_ref = _reference(x, grid, params)
    assert y.shape == (B, n, n, out_dim)
    assert jnp.allclose(y, y_ref, **tol)

    # Test 2: small ragged row count (N = 100) -> single full-extent block.
    x2, grid2 = _make_inputs(k[7], 1, 10, in_feat, spacial_dim)
    y2 = jax.block_until_ready(pointwise_regressor(x2, grid2, params))
    y2_ref = _reference(x2, grid2, params)
    assert y2.shape == (1, 10, 10, out_dim)
    assert jnp.allclose(y2, y2_ref, **tol)

    # Test 3: N = 576 with tm=256 -> exercises the aligned-main + ragged-tail path.
    x3, grid3 = _make_inputs(k[8], 1, 24, in_feat, spacial_dim)
    y3 = jax.block_until_ready(pointwise_regressor(x3, grid3, params, tm=256))
    y3_ref = _reference(x3, grid3, params)
    assert y3.shape == (1, 24, 24, out_dim)
    assert jnp.allclose(y3, y3_ref, **tol)

    print("KERNEL_OK")
</pallas_src>

<mosaic_0001>
module attributes {stable_mosaic.version = 11 : i64} {
  func.func @_pointwise_regressor_kernel(%arg0: i32, %arg1: memref<512x30xf32, #tpu.memory_space<vmem>>, %arg2: memref<512x2xf32, #tpu.memory_space<vmem>>, %arg3: memref<30x32xf32, #tpu.memory_space<vmem>>, %arg4: memref<2x32xf32, #tpu.memory_space<vmem>>, %arg5: memref<1x32xf32, #tpu.memory_space<vmem>>, %arg6: memref<32x5xf32, #tpu.memory_space<vmem>>, %arg7: memref<1x5xf32, #tpu.memory_space<vmem>>, %arg8: memref<512x5xf32, #tpu.memory_space<vmem>>) attributes {dimension_semantics = [#tpu.dimension_semantics<parallel>], iteration_bounds = array<i64: 1>, scalar_prefetch = 0 : i64, scratch_operands = 0 : i64, tpu.core_type = #tpu.core_type<tc>, window_params = [{transform_indices = @transform_0, window_bounds = array<i64: 512, 30>}, {transform_indices = @transform_1, window_bounds = array<i64: 512, 2>}, {pipeline_mode = #tpu.pipeline_mode<synchronous>, transform_indices = @transform_2, window_bounds = array<i64: 30, 32>}, {pipeline_mode = #tpu.pipeline_mode<synchronous>, transform_indices = @transform_3, window_bounds = array<i64: 2, 32>}, {pipeline_mode = #tpu.pipeline_mode<synchronous>, transform_indices = @transform_4, window_bounds = array<i64: 1, 32>}, {pipeline_mode = #tpu.pipeline_mode<synchronous>, transform_indices = @transform_5, window_bounds = array<i64: 32, 5>}, {pipeline_mode = #tpu.pipeline_mode<synchronous>, transform_indices = @transform_6, window_bounds = array<i64: 1, 5>}, {transform_indices = @transform_7, window_bounds = array<i64: 512, 5>}]} {
    %c0 = arith.constant 0 : index
    %c0_0 = arith.constant 0 : index
    %0 = vector.load %arg1[%c0, %c0_0] : memref<512x30xf32, #tpu.memory_space<vmem>>, vector<512x30xf32>
    %c0_1 = arith.constant 0 : index
    %c0_2 = arith.constant 0 : index
    %1 = vector.load %arg3[%c0_1, %c0_2] : memref<30x32xf32, #tpu.memory_space<vmem>>, vector<30x32xf32>
    %cst = arith.constant dense<0.000000e+00> : vector<512x32xf32>
    %2 = tpu.matmul %0, %1, %cst {dimension_numbers = #tpu.dot_dimension_numbers<[1], [0], [0], [1], [0, 0, 1, 1], [], []>} : vector<512x30xf32>, vector<30x32xf32>, vector<512x32xf32> -> vector<512x32xf32>
    %c0_3 = arith.constant 0 : index
    %c0_4 = arith.constant 0 : index
    %3 = vector.load %arg2[%c0_3, %c0_4] : memref<512x2xf32, #tpu.memory_space<vmem>>, vector<512x2xf32>
    %c0_5 = arith.constant 0 : index
    %c0_6 = arith.constant 0 : index
    %4 = vector.load %arg4[%c0_5, %c0_6] : memref<2x32xf32, #tpu.memory_space<vmem>>, vector<2x32xf32>
    %5 = vector.extract_strided_slice %3 {offsets = [0, 0], sizes = [512, 1], strides = [1, 1]} : vector<512x2xf32> to vector<512x1xf32>
    %6 = vector.extract_strided_slice %4 {offsets = [0, 0], sizes = [1, 32], strides = [1, 1]} : vector<2x32xf32> to vector<1x32xf32>
    %7 = vector.broadcast %5 : vector<512x1xf32> to vector<512x32xf32>
    %8 = vector.broadcast %6 : vector<1x32xf32> to vector<512x32xf32>
    %9 = arith.mulf %7, %8 : vector<512x32xf32>
    %10 = arith.addf %2, %9 : vector<512x32xf32>
    %11 = vector.extract_strided_slice %3 {offsets = [0, 1], sizes = [512, 1], strides = [1, 1]} : vector<512x2xf32> to vector<512x1xf32>
    %12 = vector.extract_strided_slice %4 {offsets = [1, 0], sizes = [1, 32], strides = [1, 1]} : vector<2x32xf32> to vector<1x32xf32>
    %13 = vector.broadcast %11 : vector<512x1xf32> to vector<512x32xf32>
    %14 = vector.broadcast %12 : vector<1x32xf32> to vector<512x32xf32>
    %15 = arith.mulf %13, %14 : vector<512x32xf32>
    %16 = arith.addf %10, %15 : vector<512x32xf32>
    %c0_7 = arith.constant 0 : index
    %c0_8 = arith.constant 0 : index
    %17 = vector.load %arg5[%c0_7, %c0_8] : memref<1x32xf32, #tpu.memory_space<vmem>>, vector<1x32xf32>
    %18 = vector.broadcast %17 : vector<1x32xf32> to vector<512x32xf32>
    %19 = arith.addf %16, %18 : vector<512x32xf32>
    %cst_9 = arith.constant 0.000000e+00 : f32
    %20 = vector.broadcast %cst_9 : f32 to vector<512x32xf32>
    %21 = arith.maximumf %19, %20 : vector<512x32xf32>
    %c0_10 = arith.constant 0 : index
    %c0_11 = arith.constant 0 : index
    %22 = vector.load %arg6[%c0_10, %c0_11] : memref<32x5xf32, #tpu.memory_space<vmem>>, vector<32x5xf32>
    %cst_12 = arith.constant dense<0.000000e+00> : vector<512x5xf32>
    %23 = tpu.matmul %21, %22, %cst_12 {dimension_numbers = #tpu.dot_dimension_numbers<[1], [0], [0], [1], [0, 0, 1, 1], [], []>} : vector<512x32xf32>, vector<32x5xf32>, vector<512x5xf32> -> vector<512x5xf32>
    %c0_13 = arith.constant 0 : index
    %c0_14 = arith.constant 0 : index
    %24 = vector.load %arg7[%c0_13, %c0_14] : memref<1x5xf32, #tpu.memory_space<vmem>>, vector<1x5xf32>
    %25 = vector.broadcast %24 : vector<1x5xf32> to vector<512x5xf32>
    %26 = arith.addf %23, %25 : vector<512x5xf32>
    %c0_15 = arith.constant 0 : index
    %c0_16 = arith.constant 0 : index
    %27 = vector.load %arg8[%c0_15, %c0_16] : memref<512x5xf32, #tpu.memory_space<vmem>>, vector<512x5xf32>
    tpu.vector_store %arg8[%c0_15, %c0_16], %26 {strides = array<i32>} : memref<512x5xf32, #tpu.memory_space<vmem>>, vector<512x5xf32>,
    return
  }
  func.func @transform_0(%arg0: i32) -> (i32, i32) {
    %c0_i32 = arith.constant 0 : i32
    %c0_i32_0 = arith.constant 0 : i32
    return %arg0, %c0_i32 : i32, i32
  }
  func.func @transform_1(%arg0: i32) -> (i32, i32) {
    %c0_i32 = arith.constant 0 : i32
    %c0_i32_0 = arith.constant 0 : i32
    return %arg0, %c0_i32 : i32, i32
  }
  func.func @transform_2(%arg0: i32) -> (i32, i32) {
    %c0_i32 = arith.constant 0 : i32
    %c0_i32_0 = arith.constant 0 : i32
    %c0_i32_1 = arith.constant 0 : i32
    return %c0_i32, %c0_i32_0 : i32, i32
  }
  func.func @transform_3(%arg0: i32) -> (i32, i32) {
    %c0_i32 = arith.constant 0 : i32
    %c0_i32_0 = arith.constant 0 : i32
    %c0_i32_1 = arith.constant 0 : i32
    return %c0_i32, %c0_i32_0 : i32, i32
  }
  func.func @transform_4(%arg0: i32) -> (i32, i32) {
    %c0_i32 = arith.constant 0 : i32
    %c0_i32_0 = arith.constant 0 : i32
    %c0_i32_1 = arith.constant 0 : i32
    return %c0_i32, %c0_i32_0 : i32, i32
  }
  func.func @transform_5(%arg0: i32) -> (i32, i32) {
    %c0_i32 = arith.constant 0 : i32
    %c0_i32_0 = arith.constant 0 : i32
    %c0_i32_1 = arith.constant 0 : i32
    return %c0_i32, %c0_i32_0 : i32, i32
  }
  func.func @transform_6(%arg0: i32) -> (i32, i32) {
    %c0_i32 = arith.constant 0 : i32
    %c0_i32_0 = arith.constant 0 : i32
    %c0_i32_1 = arith.constant 0 : i32
    return %c0_i32, %c0_i32_0 : i32, i32
  }
  func.func @transform_7(%arg0: i32) -> (i32, i32) {
    %c0_i32 = arith.constant 0 : i32
    %c0_i32_0 = arith.constant 0 : i32
    return %arg0, %c0_i32 : i32, i32
  }
}

</mosaic_0001>

<llo_original>
// kernel: pointwise_regressor.1
$region0: #{pointwise_regressor.1}
  #allocation0 [shape = 'u32[]', space=smem, size = 0x4, offset = 0x4, fixed_abs, tag = 'smem constant byte address 0x4 - core index']
  #allocation1 [shape = 'u32[144,128]{1,0:T(1,128)}', space=vmem, size = 0x12000, scoped, tag = 'internal scratch']
  %s0 = inlined_call_operand.vmem [shape: f32[512,30], index: 0, kind: input, shape index: {}]
  %s1 = inlined_call_operand.vmem [shape: f32[512,2], index: 1, kind: input, shape index: {}]
  %s2 = inlined_call_operand.vmem [shape: f32[30,32], index: 2, kind: input, shape index: {}]
  %s3 = inlined_call_operand.vmem [shape: f32[2,32], index: 3, kind: input, shape index: {}]
  %s4 = inlined_call_operand.vmem [shape: f32[1,32], index: 4, kind: input, shape index: {}]
  %s5 = inlined_call_operand.vmem [shape: f32[32,5], index: 5, kind: input, shape index: {}]
  %s6 = inlined_call_operand.vmem [shape: f32[1,5], index: 6, kind: input, shape index: {}]
  %s7 = inlined_call_operand.vmem [shape: f32[512,5], index: 7, kind: output, shape index: {}]
  %s8 = sld [smem:[#allocation0]]
  $region38: #{pointwise_regressor.1} parent=0
    _
  %s10 = ssub.s32 1, %s8
  %s11 = scalar_select 0, %s10, %s8
  // Predicated region
  $region2: #{pointwise_regressor.1} parent=0 // pred_check
    _
  $region3: #{pointwise_regressor.1} parent=0 // pred_check_branch
    %13 = sbr.rel (0) target = $region5
  $region4: #{pointwise_regressor.1} parent=0 // pred_region
    _
  $region5: #{pointwise_regressor.1} parent=0 // pred_fallthru
    _
  // Predicated region
  $region6: #{pointwise_regressor.1} parent=0 // pred_check
    _
  $region7: #{pointwise_regressor.1} parent=0 // pred_check_branch
    %15 = sbr.rel (0) target = $region9
  $region8: #{pointwise_regressor.1} parent=0 // pred_region
    _
  $region9: #{pointwise_regressor.1} parent=0 // pred_fallthru
    _
  // Predicated region
  $region10: #{pointwise_regressor.1} parent=0 // pred_check
    _
  $region11: #{pointwise_regressor.1} parent=0 // pred_check_branch
    %17 = sbr.rel (0) target = $region13
  $region12: #{pointwise_regressor.1} parent=0 // pred_region
    _
  $region13: #{pointwise_regressor.1} parent=0 // pred_fallthru
    _
  // Predicated region
  $region14: #{pointwise_regressor.1} parent=0 // pred_check
    _
  $region15: #{pointwise_regressor.1} parent=0 // pred_check_branch
    %19 = sbr.rel (0) target = $region17
  $region16: #{pointwise_regressor.1} parent=0 // pred_region
    _
  $region17: #{pointwise_regressor.1} parent=0 // pred_fallthru
    _
  // Predicated region
  $region18: #{pointwise_regressor.1} parent=0 // pred_check
    _
  $region19: #{pointwise_regressor.1} parent=0 // pred_check_branch
    %21 = sbr.rel (0) target = $region21
  $region20: #{pointwise_regressor.1} parent=0 // pred_region
    _
  $region21: #{pointwise_regressor.1} parent=0 // pred_fallthru
    _
  // Predicated region
  $region22: #{pointwise_regressor.1} parent=0 // pred_check
    _
  $region23: #{pointwise_regressor.1} parent=0 // pred_check_branch
    %23 = sbr.rel (0) target = $region25
  $region24: #{pointwise_regressor.1} parent=0 // pred_region
    _
  $region25: #{pointwise_regressor.1} parent=0 // pred_fallthru
    _
  // Predicated region
  $region26: #{pointwise_regressor.1} parent=0 // pred_check
    _
  $region27: #{pointwise_regressor.1} parent=0 // pred_check_branch
    %25 = sbr.rel (0) target = $region29
  $region28: #{pointwise_regressor.1} parent=0 // pred_region
    _
  $region29: #{pointwise_regressor.1} parent=0 // pred_fallthru
    _
  %v26 = vld [vmem:[%s0] sm:$0xff]
  %v27 = vld [vmem:[%s0 + $0x8] sm:$0xff]
  %v28 = vld [vmem:[%s0 + $0x10] sm:$0xff]
  %v29 = vld [vmem:[%s0 + $0x18] sm:$0xff]
  %v30 = vld [vmem:[%s0 + $0x20] sm:$0xff]
  %v31 = vld [vmem:[%s0 + $0x28] sm:$0xff]
  %v32 = vld [vmem:[%s0 + $0x30] sm:$0xff]
  %v33 = vld [vmem:[%s0 + $0x38] sm:$0xff]
  %v34 = vld [vmem:[%s0 + $0x40] sm:$0xff]
  %v35 = vld [vmem:[%s0 + $0x48] sm:$0xff]
  %v36 = vld [vmem:[%s0 + $0x50] sm:$0xff]
  %v37 = vld [vmem:[%s0 + $0x58] sm:$0xff]
  %v38 = vld [vmem:[%s0 + $0x60] sm:$0xff]
  %v39 = vld [vmem:[%s0 + $0x68] sm:$0xff]
  %v40 = vld [vmem:[%s0 + $0x70] sm:$0xff]
  %v41 = vld [vmem:[%s0 + $0x78] sm:$0xff]
  %v42 = vld [vmem:[%s0 + $0x80] sm:$0xff]
  %v43 = vld [vmem:[%s0 + $0x88] sm:$0xff]
  %v44 = vld [vmem:[%s0 + $0x90] sm:$0xff]
  %v45 = vld [vmem:[%s0 + $0x98] sm:$0xff]
  %v46 = vld [vmem:[%s0 + $0xa0] sm:$0xff]
  %v47 = vld [vmem:[%s0 + $0xa8] sm:$0xff]
  %v48 = vld [vmem:[%s0 + $0xb0] sm:$0xff]
  %v49 = vld [vmem:[%s0 + $0xb8] sm:$0xff]
  %v50 = vld [vmem:[%s0 + $0xc0] sm:$0xff]
  %v51 = vld [vmem:[%s0 + $0xc8] sm:$0xff]
  %v52 = vld [vmem:[%s0 + $0xd0] sm:$0xff]
  %v53 = vld [vmem:[%s0 + $0xd8] sm:$0xff]
  %v54 = vld [vmem:[%s0 + $0xe0] sm:$0xff]
  %v55 = vld [vmem:[%s0 + $0xe8] sm:$0xff]
  %v56 = vld [vmem:[%s0 + $0xf0] sm:$0xff]
  %v57 = vld [vmem:[%s0 + $0xf8] sm:$0xff]
  %v58 = vld [vmem:[%s0 + $0x100] sm:$0xff]
  %v59 = vld [vmem:[%s0 + $0x108] sm:$0xff]
  %v60 = vld [vmem:[%s0 + $0x110] sm:$0xff]
  %v61 = vld [vmem:[%s0 + $0x118] sm:$0xff]
  %v62 = vld [vmem:[%s0 + $0x120] sm:$0xff]
  %v63 = vld [vmem:[%s0 + $0x128] sm:$0xff]
  %v64 = vld [vmem:[%s0 + $0x130] sm:$0xff]
  %v65 = vld [vmem:[%s0 + $0x138] sm:$0xff]
  %v66 = vld [vmem:[%s0 + $0x140] sm:$0xff]
  %v67 = vld [vmem:[%s0 + $0x148] sm:$0xff]
  %v68 = vld [vmem:[%s0 + $0x150] sm:$0xff]
  %v69 = vld [vmem:[%s0 + $0x158] sm:$0xff]
  %v70 = vld [vmem:[%s0 + $0x160] sm:$0xff]
  %v71 = vld [vmem:[%s0 + $0x168] sm:$0xff]
  %v72 = vld [vmem:[%s0 + $0x170] sm:$0xff]
  %v73 = vld [vmem:[%s0 + $0x178] sm:$0xff]
  %v74 = vld [vmem:[%s0 + $0x180] sm:$0xff]
  %v75 = vld [vmem:[%s0 + $0x188] sm:$0xff]
  %v76 = vld [vmem:[%s0 + $0x190] sm:$0xff]
  %v77 = vld [vmem:[%s0 + $0x198] sm:$0xff]
  %v78 = vld [vmem:[%s0 + $0x1a0] sm:$0xff]
  %v79 = vld [vmem:[%s0 + $0x1a8] sm:$0xff]
  %v80 = vld [vmem:[%s0 + $0x1b0] sm:$0xff]
  %v81 = vld [vmem:[%s0 + $0x1b8] sm:$0xff]
  %v82 = vld [vmem:[%s0 + $0x1c0] sm:$0xff]
  %v83 = vld [vmem:[%s0 + $0x1c8] sm:$0xff]
  %v84 = vld [vmem:[%s0 + $0x1d0] sm:$0xff]
  %v85 = vld [vmem:[%s0 + $0x1d8] sm:$0xff]
  %v86 = vld [vmem:[%s0 + $0x1e0] sm:$0xff]
  %v87 = vld [vmem:[%s0 + $0x1e8] sm:$0xff]
  %v88 = vld [vmem:[%s0 + $0x1f0] sm:$0xff]
  %v89 = vld [vmem:[%s0 + $0x1f8] sm:$0xff]
  %v90 = vld [vmem:[%s2] sm:$0xff]
  %v91 = vld [vmem:[%s2 + $0x8] sm:$0xff]
  %v92 = vld [vmem:[%s2 + $0x10] sm:$0xff]
  %v93 = vld [vmem:[%s2 + $0x18] sm:$0x3f]
  %v94 = vld [vmem:[%s1] sm:$0xff]
  %v95 = vld [vmem:[%s1 + $0x8] sm:$0xff]
  %v96 = vld [vmem:[%s1 + $0x10] sm:$0xff]
  %v97 = vld [vmem:[%s1 + $0x18] sm:$0xff]
  %v98 = vld [vmem:[%s1 + $0x20] sm:$0xff]
  %v99 = vld [vmem:[%s1 + $0x28] sm:$0xff]
  %v100 = vld [vmem:[%s1 + $0x30] sm:$0xff]
  %v101 = vld [vmem:[%s1 + $0x38] sm:$0xff]
  %v102 = vld [vmem:[%s1 + $0x40] sm:$0xff]
  %v103 = vld [vmem:[%s1 + $0x48] sm:$0xff]
  %v104 = vld [vmem:[%s1 + $0x50] sm:$0xff]
  %v105 = vld [vmem:[%s1 + $0x58] sm:$0xff]
  %v106 = vld [vmem:[%s1 + $0x60] sm:$0xff]
  %v107 = vld [vmem:[%s1 + $0x68] sm:$0xff]
  %v108 = vld [vmem:[%s1 + $0x70] sm:$0xff]
  %v109 = vld [vmem:[%s1 + $0x78] sm:$0xff]
  %v110 = vld [vmem:[%s1 + $0x80] sm:$0xff]
  %v111 = vld [vmem:[%s1 + $0x88] sm:$0xff]
  %v112 = vld [vmem:[%s1 + $0x90] sm:$0xff]
  %v113 = vld [vmem:[%s1 + $0x98] sm:$0xff]
  %v114 = vld [vmem:[%s1 + $0xa0] sm:$0xff]
  %v115 = vld [vmem:[%s1 + $0xa8] sm:$0xff]
  %v116 = vld [vmem:[%s1 + $0xb0] sm:$0xff]
  %v117 = vld [vmem:[%s1 + $0xb8] sm:$0xff]
  %v118 = vld [vmem:[%s1 + $0xc0] sm:$0xff]
  %v119 = vld [vmem:[%s1 + $0xc8] sm:$0xff]
  %v120 = vld [vmem:[%s1 + $0xd0] sm:$0xff]
  %v121 = vld [vmem:[%s1 + $0xd8] sm:$0xff]
  %v122 = vld [vmem:[%s1 + $0xe0] sm:$0xff]
  %v123 = vld [vmem:[%s1 + $0xe8] sm:$0xff]
  %v124 = vld [vmem:[%s1 + $0xf0] sm:$0xff]
  %v125 = vld [vmem:[%s1 + $0xf8] sm:$0xff]
  %v126 = vld [vmem:[%s1 + $0x100] sm:$0xff]
  %v127 = vld [vmem:[%s1 + $0x108] sm:$0xff]
  %v128 = vld [vmem:[%s1 + $0x110] sm:$0xff]
  %v129 = vld [vmem:[%s1 + $0x118] sm:$0xff]
  %v130 = vld [vmem:[%s1 + $0x120] sm:$0xff]
  %v131 = vld [vmem:[%s1 + $0x128] sm:$0xff]
  %v132 = vld [vmem:[%s1 + $0x130] sm:$0xff]
  %v133 = vld [vmem:[%s1 + $0x138] sm:$0xff]
  %v134 = vld [vmem:[%s1 + $0x140] sm:$0xff]
  %v135 = vld [vmem:[%s1 + $0x148] sm:$0xff]
  %v136 = vld [vmem:[%s1 + $0x150] sm:$0xff]
  %v137 = vld [vmem:[%s1 + $0x158] sm:$0xff]
  %v138 = vld [vmem:[%s1 + $0x160] sm:$0xff]
  %v139 = vld [vmem:[%s1 + $0x168] sm:$0xff]
  %v140 = vld [vmem:[%s1 + $0x170] sm:$0xff]
  %v141 = vld [vmem:[%s1 + $0x178] sm:$0xff]
  %v142 = vld [vmem:[%s1 + $0x180] sm:$0xff]
  %v143 = vld [vmem:[%s1 + $0x188] sm:$0xff]
  %v144 = vld [vmem:[%s1 + $0x190] sm:$0xff]
  %v145 = vld [vmem:[%s1 + $0x198] sm:$0xff]
  %v146 = vld [vmem:[%s1 + $0x1a0] sm:$0xff]
  %v147 = vld [vmem:[%s1 + $0x1a8] sm:$0xff]
  %v148 = vld [vmem:[%s1 + $0x1b0] sm:$0xff]
  %v149 = vld [vmem:[%s1 + $0x1b8] sm:$0xff]
  %v150 = vld [vmem:[%s1 + $0x1c0] sm:$0xff]
  %v151 = vld [vmem:[%s1 + $0x1c8] sm:$0xff]
  %v152 = vld [vmem:[%s1 + $0x1d0] sm:$0xff]
  %v153 = vld [vmem:[%s1 + $0x1d8] sm:$0xff]
  %v154 = vld [vmem:[%s1 + $0x1e0] sm:$0xff]
  %v155 = vld [vmem:[%s1 + $0x1e8] sm:$0xff]
  %v156 = vld [vmem:[%s1 + $0x1f0] sm:$0xff]
  %v157 = vld [vmem:[%s1 + $0x1f8] sm:$0xff]
  %v158 = vld [vmem:[%s3] sm:$0x3]
  %160 = vset.pattern.permute.xlu0 0
  %161 = vperm.xlu0 %160, %v94
  %v162 = vpop.permute.xlu0 %161
  %165 = vset.pattern.permute.xlu0 0
  %166 = vperm.xlu0 %165, %v95
  %v167 = vpop.permute.xlu0 %166
  %170 = vset.pattern.permute.xlu0 0
  %171 = vperm.xlu0 %170, %v96
  %v172 = vpop.permute.xlu0 %171
  %175 = vset.pattern.permute.xlu0 0
  %176 = vperm.xlu0 %175, %v97
  %v177 = vpop.permute.xlu0 %176
  %180 = vset.pattern.permute.xlu0 0
  %181 = vperm.xlu0 %180, %v98
  %v182 = vpop.permute.xlu0 %181
  %185 = vset.pattern.permute.xlu0 0
  %186 = vperm.xlu0 %185, %v99
  %v187 = vpop.permute.xlu0 %186
  %190 = vset.pattern.permute.xlu0 0
  %191 = vperm.xlu0 %190, %v100
  %v192 = vpop.permute.xlu0 %191
  %195 = vset.pattern.permute.xlu0 0
  %196 = vperm.xlu0 %195, %v101
  %v197 = vpop.permute.xlu0 %196
  %200 = vset.pattern.permute.xlu0 0
  %201 = vperm.xlu0 %200, %v102
  %v202 = vpop.permute.xlu0 %201
  %205 = vset.pattern.permute.xlu0 0
  %206 = vperm.xlu0 %205, %v103
  %v207 = vpop.permute.xlu0 %206
  %210 = vset.pattern.permute.xlu0 0
  %211 = vperm.xlu0 %210, %v104
  %v212 = vpop.permute.xlu0 %211
  %215 = vset.pattern.permute.xlu0 0
  %216 = vperm.xlu0 %215, %v105
  %v217 = vpop.permute.xlu0 %216
  %220 = vset.pattern.permute.xlu0 0
  %221 = vperm.xlu0 %220, %v106
  %v222 = vpop.permute.xlu0 %221
  %225 = vset.pattern.permute.xlu0 0
  %226 = vperm.xlu0 %225, %v107
  %v227 = vpop.permute.xlu0 %226
  %230 = vset.pattern.permute.xlu0 0
  %231 = vperm.xlu0 %230, %v108
  %v232 = vpop.permute.xlu0 %231
  %235 = vset.pattern.permute.xlu0 0
  %236 = vperm.xlu0 %235, %v109
  %v237 = vpop.permute.xlu0 %236
  %240 = vset.pattern.permute.xlu0 0
  %241 = vperm.xlu0 %240, %v110
  %v242 = vpop.permute.xlu0 %241
  %245 = vset.pattern.permute.xlu0 0
  %246 = vperm.xlu0 %245, %v111
  %v247 = vpop.permute.xlu0 %246
  %250 = vset.pattern.permute.xlu0 0
  %251 = vperm.xlu0 %250, %v112
  %v252 = vpop.permute.xlu0 %251
  %255 = vset.pattern.permute.xlu0 0
  %256 = vperm.xlu0 %255, %v113
  %v257 = vpop.permute.xlu0 %256
  %260 = vset.pattern.permute.xlu0 0
  %261 = vperm.xlu0 %260, %v114
  %v262 = vpop.permute.xlu0 %261
  %265 = vset.pattern.permute.xlu0 0
  %266 = vperm.xlu0 %265, %v115
  %v267 = vpop.permute.xlu0 %266
  %270 = vset.pattern.permute.xlu0 0
  %271 = vperm.xlu0 %270, %v116
  %v272 = vpop.permute.xlu0 %271
  %275 = vset.pattern.permute.xlu0 0
  %276 = vperm.xlu0 %275, %v117
  %v277 = vpop.permute.xlu0 %276
  %280 = vset.pattern.permute.xlu0 0
  %281 = vperm.xlu0 %280, %v118
  %v282 = vpop.permute.xlu0 %281
  %285 = vset.pattern.permute.xlu0 0
  %286 = vperm.xlu0 %285, %v119
  %v287 = vpop.permute.xlu0 %286
  %290 = vset.pattern.permute.xlu0 0
  %291 = vperm.xlu0 %290, %v120
  %v292 = vpop.permute.xlu0 %291
  %295 = vset.pattern.permute.xlu0 0
  %296 = vperm.xlu0 %295, %v121
  %v297 = vpop.permute.xlu0 %296
  %300 = vset.pattern.permute.xlu0 0
  %301 = vperm.xlu0 %300, %v122
  %v302 = vpop.permute.xlu0 %301
  %305 = vset.pattern.permute.xlu0 0
  %306 = vperm.xlu0 %305, %v123
  %v307 = vpop.permute.xlu0 %306
  %310 = vset.pattern.permute.xlu0 0
  %311 = vperm.xlu0 %310, %v124
  %v312 = vpop.permute.xlu0 %311
  %315 = vset.pattern.permute.xlu0 0
  %316 = vperm.xlu0 %315, %v125
  %v317 = vpop.permute.xlu0 %316
  %320 = vset.pattern.permute.xlu0 0
  %321 = vperm.xlu0 %320, %v126
  %v322 = vpop.permute.xlu0 %321
  %325 = vset.pattern.permute.xlu0 0
  %326 = vperm.xlu0 %325, %v127
  %v327 = vpop.permute.xlu0 %326
  %330 = vset.pattern.permute.xlu0 0
  %331 = vperm.xlu0 %330, %v128
  %v332 = vpop.permute.xlu0 %331
  %335 = vset.pattern.permute.xlu0 0
  %336 = vperm.xlu0 %335, %v129
  %v337 = vpop.permute.xlu0 %336
  %340 = vset.pattern.permute.xlu0 0
  %341 = vperm.xlu0 %340, %v130
  %v342 = vpop.permute.xlu0 %341
  %345 = vset.pattern.permute.xlu0 0
  %346 = vperm.xlu0 %345, %v131
  %v347 = vpop.permute.xlu0 %346
  %350 = vset.pattern.permute.xlu0 0
  %351 = vperm.xlu0 %350, %v132
  %v352 = vpop.permute.xlu0 %351
  %355 = vset.pattern.permute.xlu0 0
  %356 = vperm.xlu0 %355, %v133
  %v357 = vpop.permute.xlu0 %356
  %360 = vset.pattern.permute.xlu0 0
  %361 = vperm.xlu0 %360, %v134
  %v362 = vpop.permute.xlu0 %361
  %365 = vset.pattern.permute.xlu0 0
  %366 = vperm.xlu0 %365, %v135
  %v367 = vpop.permute.xlu0 %366
  %370 = vset.pattern.permute.xlu0 0
  %371 = vperm.xlu0 %370, %v136
  %v372 = vpop.permute.xlu0 %371
  %375 = vset.pattern.permute.xlu0 0
  %376 = vperm.xlu0 %375, %v137
  %v377 = vpop.permute.xlu0 %376
  %380 = vset.pattern.permute.xlu0 0
  %381 = vperm.xlu0 %380, %v138
  %v382 = vpop.permute.xlu0 %381
  %385 = vset.pattern.permute.xlu0 0
  %386 = vperm.xlu0 %385, %v139
  %v387 = vpop.permute.xlu0 %386
  %390 = vset.pattern.permute.xlu0 0
  %391 = vperm.xlu0 %390, %v140
  %v392 = vpop.permute.xlu0 %391
  %395 = vset.pattern.permute.xlu0 0
  %396 = vperm.xlu0 %395, %v141
  %v397 = vpop.permute.xlu0 %396
  %400 = vset.pattern.permute.xlu0 0
  %401 = vperm.xlu0 %400, %v142
  %v402 = vpop.permute.xlu0 %401
  %405 = vset.pattern.permute.xlu0 0
  %406 = vperm.xlu0 %405, %v143
  %v407 = vpop.permute.xlu0 %406
  %410 = vset.pattern.permute.xlu0 0
  %411 = vperm.xlu0 %410, %v144
  %v412 = vpop.permute.xlu0 %411
  %415 = vset.pattern.permute.xlu0 0
  %416 = vperm.xlu0 %415, %v145
  %v417 = vpop.permute.xlu0 %416
  %420 = vset.pattern.permute.xlu0 0
  %421 = vperm.xlu0 %420, %v146
  %v422 = vpop.permute.xlu0 %421
  %425 = vset.pattern.permute.xlu0 0
  %426 = vperm.xlu0 %425, %v147
  %v427 = vpop.permute.xlu0 %426
  %430 = vset.pattern.permute.xlu0 0
  %431 = vperm.xlu0 %430, %v148
  %v432 = vpop.permute.xlu0 %431
  %435 = vset.pattern.permute.xlu0 0
  %436 = vperm.xlu0 %435, %v149
  %v437 = vpop.permute.xlu0 %436
  %440 = vset.pattern.permute.xlu0 0
  %441 = vperm.xlu0 %440, %v150
  %v442 = vpop.permute.xlu0 %441
  %445 = vset.pattern.permute.xlu0 0
  %446 = vperm.xlu0 %445, %v151
  %v447 = vpop.permute.xlu0 %446
  %450 = vset.pattern.permute.xlu0 0
  %451 = vperm.xlu0 %450, %v152
  %v452 = vpop.permute.xlu0 %451
  %455 = vset.pattern.permute.xlu0 0
  %456 = vperm.xlu0 %455, %v153
  %v457 = vpop.permute.xlu0 %456
  %460 = vset.pattern.permute.xlu0 0
  %461 = vperm.xlu0 %460, %v154
  %v462 = vpop.permute.xlu0 %461
  %465 = vset.pattern.permute.xlu0 0
  %466 = vperm.xlu0 %465, %v155
  %v467 = vpop.permute.xlu0 %466
  %470 = vset.pattern.permute.xlu0 0
  %471 = vperm.xlu0 %470, %v156
  %v472 = vpop.permute.xlu0 %471
  %475 = vset.pattern.permute.xlu0 0
  %476 = vperm.xlu0 %475, %v157
  %v477 = vpop.permute.xlu0 %476
  %v479 = vlaneseq
  %v480 = vshrl.u32 %v479, 7
  %v481 = vsub.s32 0, %v480
  %v482 = vrot.slane %v158, %v481
  %v483 = vmul.f32 %v162, %v482
  %v484 = vmul.f32 %v167, %v482
  %v485 = vmul.f32 %v172, %v482
  %v486 = vmul.f32 %v177, %v482
  %v487 = vmul.f32 %v182, %v482
  %v488 = vmul.f32 %v187, %v482
  %v489 = vmul.f32 %v192, %v482
  %v490 = vmul.f32 %v197, %v482
  %v491 = vmul.f32 %v202, %v482
  %v492 = vmul.f32 %v207, %v482
  %v493 = vmul.f32 %v212, %v482
  %v494 = vmul.f32 %v217, %v482
  %v495 = vmul.f32 %v222, %v482
  %v496 = vmul.f32 %v227, %v482
  %v497 = vmul.f32 %v232, %v482
  %v498 = vmul.f32 %v237, %v482
  %v499 = vmul.f32 %v242, %v482
  %v500 = vmul.f32 %v247, %v482
  %v501 = vmul.f32 %v252, %v482
  %v502 = vmul.f32 %v257, %v482
  %v503 = vmul.f32 %v262, %v482
  %v504 = vmul.f32 %v267, %v482
  %v505 = vmul.f32 %v272, %v482
  %v506 = vmul.f32 %v277, %v482
  %v507 = vmul.f32 %v282, %v482
  %v508 = vmul.f32 %v287, %v482
  %v509 = vmul.f32 %v292, %v482
  %v510 = vmul.f32 %v297, %v482
  %v511 = vmul.f32 %v302, %v482
  %v512 = vmul.f32 %v307, %v482
  %v513 = vmul.f32 %v312, %v482
  %v514 = vmul.f32 %v317, %v482
  %v515 = vmul.f32 %v322, %v482
  %v516 = vmul.f32 %v327, %v482
  %v517 = vmul.f32 %v332, %v482
  %v518 = vmul.f32 %v337, %v482
  %v519 = vmul.f32 %v342, %v482
  %v520 = vmul.f32 %v347, %v482
  %v521 = vmul.f32 %v352, %v482
  %v522 = vmul.f32 %v357, %v482
  %v523 = vmul.f32 %v362, %v482
  %v524 = vmul.f32 %v367, %v482
  %v525 = vmul.f32 %v372, %v482
  %v526 = vmul.f32 %v377, %v482
  %v527 = vmul.f32 %v382, %v482
  %v528 = vmul.f32 %v387, %v482
  %v529 = vmul.f32 %v392, %v482
  %v530 = vmul.f32 %v397, %v482
  %v531 = vmul.f32 %v402, %v482
  %v532 = vmul.f32 %v407, %v482
  %v533 = vmul.f32 %v412, %v482
  %v534 = vmul.f32 %v417, %v482
  %v535 = vmul.f32 %v422, %v482
  %v536 = vmul.f32 %v427, %v482
  %v537 = vmul.f32 %v432, %v482
  %v538 = vmul.f32 %v437, %v482
  %v539 = vmul.f32 %v442, %v482
  %v540 = vmul.f32 %v447, %v482
  %v541 = vmul.f32 %v452, %v482
  %v542 = vmul.f32 %v457, %v482
  %v543 = vmul.f32 %v462, %v482
  %v544 = vmul.f32 %v467, %v482
  %v545 = vmul.f32 %v472, %v482
  %v546 = vmul.f32 %v477, %v482
  %vm547 = vcmask 244736
  %v549 = vsel %vm547, %v26, 0
  %v552 = vsel %vm547, %v27, 0
  %v555 = vsel %vm547, %v28, 0
  %v558 = vsel %vm547, %v29, 0
  %v561 = vsel %vm547, %v30, 0
  %v564 = vsel %vm547, %v31, 0
  %v567 = vsel %vm547, %v32, 0
  %v570 = vsel %vm547, %v33, 0
  %v573 = vsel %vm547, %v34, 0
  %v576 = vsel %vm547, %v35, 0
  %v579 = vsel %vm547, %v36, 0
  %v582 = vsel %vm547, %v37, 0
  %v585 = vsel %vm547, %v38, 0
  %v588 = vsel %vm547, %v39, 0
  %v591 = vsel %vm547, %v40, 0
  %v594 = vsel %vm547, %v41, 0
  %v597 = vsel %vm547, %v42, 0
  %v600 = vsel %vm547, %v43, 0
  %v603 = vsel %vm547, %v44, 0
  %v606 = vsel %vm547, %v45, 0
  %v609 = vsel %vm547, %v46, 0
  %v612 = vsel %vm547, %v47, 0
  %v615 = vsel %vm547, %v48, 0
  %v618 = vsel %vm547, %v49, 0
  %v621 = vsel %vm547, %v50, 0
  %v624 = vsel %vm547, %v51, 0
  %v627 = vsel %vm547, %v52, 0
  %v630 = vsel %vm547, %v53, 0
  %v633 = vsel %vm547, %v54, 0
  %v636 = vsel %vm547, %v55, 0
  %v639 = vsel %vm547, %v56, 0
  %v642 = vsel %vm547, %v57, 0
  %v645 = vsel %vm547, %v58, 0
  %v648 = vsel %vm547, %v59, 0
  %v651 = vsel %vm547, %v60, 0
  %v654 = vsel %vm547, %v61, 0
  %v657 = vsel %vm547, %v62, 0
  %v660 = vsel %vm547, %v63, 0
  %v663 = vsel %vm547, %v64, 0
  %v666 = vsel %vm547, %v65, 0
  %v669 = vsel %vm547, %v66, 0
  %v672 = vsel %vm547, %v67, 0
  %v675 = vsel %vm547, %v68, 0
  %v678 = vsel %vm547, %v69, 0
  %v681 = vsel %vm547, %v70, 0
  %v684 = vsel %vm547, %v71, 0
  %v687 = vsel %vm547, %v72, 0
  %v690 = vsel %vm547, %v73, 0
  %v693 = vsel %vm547, %v74, 0
  %v696 = vsel %vm547, %v75, 0
  %v699 = vsel %vm547, %v76, 0
  %v702 = vsel %vm547, %v77, 0
  %v705 = vsel %vm547, %v78, 0
  %v708 = vsel %vm547, %v79, 0
  %v711 = vsel %vm547, %v80, 0
  %v714 = vsel %vm547, %v81, 0
  %v717 = vsel %vm547, %v82, 0
  %v720 = vsel %vm547, %v83, 0
  %v723 = vsel %vm547, %v84, 0
  %v726 = vsel %vm547, %v85, 0
  %v729 = vsel %vm547, %v86, 0
  %v732 = vsel %vm547, %v87, 0
  %v735 = vsel %vm547, %v88, 0
  %v738 = vsel %vm547, %v89, 0
  %vm740 = vcmask 1045504
  %v742 = vsel %vm740, %v93, 0
  %744 = vmatprep.subr.mxu0 0.0
  %745 = vmatpush1.msra.mxu0 %v90
  %746 = vmatprep.subr.mxu0 0.0
  %747 = vmatpush1.msra.mxu0 %v91
  %748 = vmatprep.subr.mxu0 0.0
  %749 = vmatpush1.msra.mxu0 %v92
  %750 = vmatprep.subr.mxu0 0.0
  %751 = vmatpush1.msra.mxu0 %v742
  %752 = vmatprep.subr.mxu0 0.0
  %753 = vmatpush1.msra.mxu0 0.0
  %754 = vmatprep.subr.mxu0 0.0
  %755 = vmatpush1.msra.mxu0 0.0
  %756 = vmatprep.subr.mxu0 0.0
  %757 = vmatpush1.msra.mxu0 0.0
  %758 = vmatprep.subr.mxu0 0.0
  %759 = vmatpush1.msra.mxu0 0.0
  %760 = vmatprep.subr.mxu0 0.0
  %761 = vmatpush1.msra.mxu0 0.0
  %762 = vmatprep.subr.mxu0 0.0
  %763 = vmatpush1.msra.mxu0 0.0
  %764 = vmatprep.subr.mxu0 0.0
  %765 = vmatpush1.msra.mxu0 0.0
  %766 = vmatprep.subr.mxu0 0.0
  %767 = vmatpush1.msra.mxu0 0.0
  %768 = vmatprep.subr.mxu0 0.0
  %769 = vmatpush1.msra.mxu0 0.0
  %770 = vmatprep.subr.mxu0 0.0
  %771 = vmatpush1.msra.mxu0 0.0
  %772 = vmatprep.subr.mxu0 0.0
  %773 = vmatpush1.msra.mxu0 0.0
  %774 = vmatprep.subr.mxu0 0.0
  %775 = vmatpush1.msra.mxu0 0.0
  %776 = vmatprep.subr.mxu0 0.0
  %777 = vmatpush1.msra.mxu0 0.0
  %778 = vmatprep.subr.mxu0 0.0
  %779 = vmatpush1.msra.mxu0 0.0
  %780 = vmatprep.subr.mxu0 0.0
  %781 = vmatpush1.msra.mxu0 0.0
  %782 = vmatprep.subr.mxu0 0.0
  %783 = vmatpush1.msra.mxu0 0.0
  %784 = vmatprep.subr.mxu0 0.0
  %785 = vmatpush1.msra.mxu0 0.0
  %786 = vmatprep.subr.mxu0 0.0
  %787 = vmatpush1.msra.mxu0 0.0
  %788 = vmatprep.subr.mxu0 0.0
  %789 = vmatpush1.msra.mxu0 0.0
  %790 = vmatprep.subr.mxu0 0.0
  %791 = vmatpush1.msra.mxu0 0.0
  %792 = vmatprep.subr.mxu0 0.0
  %793 = vmatpush1.msra.mxu0 0.0
  %794 = vmatprep.subr.mxu0 0.0
  %795 = vmatpush1.msra.mxu0 0.0
  %796 = vmatprep.subr.mxu0 0.0
  %797 = vmatpush1.msra.mxu0 0.0
  %798 = vmatprep.subr.mxu0 0.0
  %799 = vmatpush1.msra.mxu0 0.0
  %800 = vmatprep.subr.mxu0 0.0
  %801 = vmatpush1.msra.mxu0 0.0
  %802 = vmatprep.subr.mxu0 0.0
  %803 = vmatpush1.msra.mxu0 0.0
  %804 = vmatprep.subr.mxu0 0.0
  %805 = vmatpush1.msra.mxu0 0.0
  %806 = vmatprep.subr.mxu0 0.0
  %807 = vmatpush1.msra.mxu0 0.0
  %808 = vmatprep.mubr.f32.mxu0 0.0
  %809 = vmatmul.mubr.f32.gmra.mrb[0].mxu0 %v549
  %v810 = vpop.f32.mrb[0].mxu0
  %v811 = vadd.f32 %v483, %v810
  %v812 = vpop.f32.mrb[0].mxu0
  %813 = vmatprep.mubr.f32.mxu0 0.0
  %814 = vmatmul.mubr.f32.gmra.mrb[0].mxu0 %v552
  %v815 = vpop.f32.mrb[0].mxu0
  %v816 = vadd.f32 %v484, %v815
  %v817 = vpop.f32.mrb[0].mxu0
  %818 = vmatprep.mubr.f32.mxu0 0.0
  %819 = vmatmul.mubr.f32.gmra.mrb[0].mxu0 %v555
  %v820 = vpop.f32.mrb[0].mxu0
  %v821 = vadd.f32 %v485, %v820
  %v822 = vpop.f32.mrb[0].mxu0
  %823 = vmatprep.mubr.f32.mxu0 0.0
  %824 = vmatmul.mubr.f32.gmra.mrb[0].mxu0 %v558
  %v825 = vpop.f32.mrb[0].mxu0
  %v826 = vadd.f32 %v486, %v825
  %v827 = vpop.f32.mrb[0].mxu0
  %828 = vmatprep.mubr.f32.mxu0 0.0
  %829 = vmatmul.mubr.f32.gmra.mrb[0].mxu0 %v561
  %v830 = vpop.f32.mrb[0].mxu0
  %v831 = vadd.f32 %v487, %v830
  %v832 = vpop.f32.mrb[0].mxu0
  %833 = vmatprep.mubr.f32.mxu0 0.0
  %834 = vmatmul.mubr.f32.gmra.mrb[0].mxu0 %v564
  %v835 = vpop.f32.mrb[0].mxu0
  %v836 = vadd.f32 %v488, %v835
  %v837 = vpop.f32.mrb[0].mxu0
  %838 = vmatprep.mubr.f32.mxu0 0.0
  %839 = vmatmul.mubr.f32.gmra.mrb[0].mxu0 %v567
  %v840 = vpop.f32.mrb[0].mxu0
  %v841 = vadd.f32 %v489, %v840
  %v842 = vpop.f32.mrb[0].mxu0
  %843 = vmatprep.mubr.f32.mxu0 0.0
  %844 = vmatmul.mubr.f32.gmra.mrb[0].mxu0 %v570
  %v845 = vpop.f32.mrb[0].mxu0
  %v846 = vadd.f32 %v490, %v845
  %v847 = vpop.f32.mrb[0].mxu0
  %848 = vmatprep.mubr.f32.mxu0 0.0
  %849 = vmatmul.mubr.f32.gmra.mrb[0].mxu0 %v573
  %v850 = vpop.f32.mrb[0].mxu0
  %v851 = vadd.f32 %v491, %v850
  %v852 = vpop.f32.mrb[0].mxu0
  %853 = vmatprep.mubr.f32.mxu0 0.0
  %854 = vmatmul.mubr.f32.gmra.mrb[0].mxu0 %v576
  %v855 = vpop.f32.mrb[0].mxu0
  %v856 = vadd.f32 %v492, %v855
  %v857 = vpop.f32.mrb[0].mxu0
  %858 = vmatprep.mubr.f32.mxu0 0.0
  %859 = vmatmul.mubr.f32.gmra.mrb[0].mxu0 %v579
  %v860 = vpop.f32.mrb[0].mxu0
  %v861 = vadd.f32 %v493, %v860
  %v862 = vpop.f32.mrb[0].mxu0
  %863 = vmatprep.mubr.f32.mxu0 0.0
  %864 = vmatmul.mubr.f32.gmra.mrb[0].mxu0 %v582
  %v865 = vpop.f32.mrb[0].mxu0
  %v866 = vadd.f32 %v494, %v865
  %v867 = vpop.f32.mrb[0].mxu0
  %868 = vmatprep.mubr.f32.mxu0 0.0
  %869 = vmatmul.mubr.f32.gmra.mrb[0].mxu0 %v585
  %v870 = vpop.f32.mrb[0].mxu0
  %v871 = vadd.f32 %v495, %v870
  %v872 = vpop.f32.mrb[0].mxu0
  %873 = vmatprep.mubr.f32.mxu0 0.0
  %874 = vmatmul.mubr.f32.gmra.mrb[0].mxu0 %v588
  %v875 = vpop.f32.mrb[0].mxu0
  %v876 = vadd.f32 %v496, %v875
  %v877 = vpop.f32.mrb[0].mxu0
  %878 = vmatprep.mubr.f32.mxu0 0.0
  %879 = vmatmul.mubr.f32.gmra.mrb[0].mxu0 %v591
  %v880 = vpop.f32.mrb[0].mxu0
  %v881 = vadd.f32 %v497, %v880
  %v882 = vpop.f32.mrb[0].mxu0
  %883 = vmatprep.mubr.f32.mxu0 0.0
  %884 = vmatmul.mubr.f32.gmra.mrb[0].mxu0 %v594
  %v885 = vpop.f32.mrb[0].mxu0
  %v886 = vadd.f32 %v498, %v885
  %v887 = vpop.f32.mrb[0].mxu0
  %888 = vmatprep.mubr.f32.mxu0 0.0
  %889 = vmatmul.mubr.f32.gmra.mrb[0].mxu0 %v597
  %v890 = vpop.f32.mrb[0].mxu0
  %v891 = vadd.f32 %v499, %v890
  %v892 = vpop.f32.mrb[0].mxu0
  %893 = vmatprep.mubr.f32.mxu0 0.0
  %894 = vmatmul.mubr.f32.gmra.mrb[0].mxu0 %v600
  %v895 = vpop.f32.mrb[0].mxu0
  %v896 = vadd.f32 %v500, %v895
  %v897 = vpop.f32.mrb[0].mxu0
  %898 = vmatprep.mubr.f32.mxu0 0.0
  %899 = vmatmul.mubr.f32.gmra.mrb[0].mxu0 %v603
  %v900 = vpop.f32.mrb[0].mxu0
  %v901 = vadd.f32 %v501, %v900
  %v902 = vpop.f32.mrb[0].mxu0
  %903 = vmatprep.mubr.f32.mxu0 0.0
  %904 = vmatmul.mubr.f32.gmra.mrb[0].mxu0 %v606
  %v905 = vpop.f32.mrb[0].mxu0
  %v906 = vadd.f32 %v502, %v905
  %v907 = vpop.f32.mrb[0].mxu0
  %908 = vmatprep.mubr.f32.mxu0 0.0
  %909 = vmatmul.mubr.f32.gmra.mrb[0].mxu0 %v609
  %v910 = vpop.f32.mrb[0].mxu0
  %v911 = vadd.f32 %v503, %v910
  %v912 = vpop.f32.mrb[0].mxu0
  %913 = vmatprep.mubr.f32.mxu0 0.0
  %914 = vmatmul.mubr.f32.gmra.mrb[0].mxu0 %v612
  %v915 = vpop.f32.mrb[0].mxu0
  %v916 = vadd.f32 %v504, %v915
  %v917 = vpop.f32.mrb[0].mxu0
  %918 = vmatprep.mubr.f32.mxu0 0.0
  %919 = vmatmul.mubr.f32.gmra.mrb[0].mxu0 %v615
  %v920 = vpop.f32.mrb[0].mxu0
  %v921 = vadd.f32 %v505, %v920
  %v922 = vpop.f32.mrb[0].mxu0
  %923 = vmatprep.mubr.f32.mxu0 0.0
  %924 = vmatmul.mubr.f32.gmra.mrb[0].mxu0 %v618
  %v925 = vpop.f32.mrb[0].mxu0
  %v926 = vadd.f32 %v506, %v925
  %v927 = vpop.f32.mrb[0].mxu0
  %928 = vmatprep.mubr.f32.mxu0 0.0
  %929 = vmatmul.mubr.f32.gmra.mrb[0].mxu0 %v621
  %v930 = vpop.f32.mrb[0].mxu0
  %v931 = vadd.f32 %v507, %v930
  %v932 = vpop.f32.mrb[0].mxu0
  %933 = vmatprep.mubr.f32.mxu0 0.0
  %934 = vmatmul.mubr.f32.gmra.mrb[0].mxu0 %v624
  %v935 = vpop.f32.mrb[0].mxu0
  %v936 = vadd.f32 %v508, %v935
  %v937 = vpop.f32.mrb[0].mxu0
  %938 = vmatprep.mubr.f32.mxu0 0.0
  %939 = vmatmul.mubr.f32.gmra.mrb[0].mxu0 %v627
  %v940 = vpop.f32.mrb[0].mxu0
  %v941 = vadd.f32 %v509, %v940
  %v942 = vpop.f32.mrb[0].mxu0
  %943 = vmatprep.mubr.f32.mxu0 0.0
  %944 = vmatmul.mubr.f32.gmra.mrb[0].mxu0 %v630
  %v945 = vpop.f32.mrb[0].mxu0
  %v946 = vadd.f32 %v510, %v945
  %v947 = vpop.f32.mrb[0].mxu0
  %948 = vmatprep.mubr.f32.mxu0 0.0
  %949 = vmatmul.mubr.f32.gmra.mrb[0].mxu0 %v633
  %v950 = vpop.f32.mrb[0].mxu0
  %v951 = vadd.f32 %v511, %v950
  %v952 = vpop.f32.mrb[0].mxu0
  %953 = vmatprep.mubr.f32.mxu0 0.0
  %954 = vmatmul.mubr.f32.gmra.mrb[0].mxu0 %v636
  %v955 = vpop.f32.mrb[0].mxu0
  %v956 = vadd.f32 %v512, %v955
  %v957 = vpop.f32.mrb[0].mxu0
  %958 = vmatprep.mubr.f32.mxu0 0.0
  %959 = vmatmul.mubr.f32.gmra.mrb[0].mxu0 %v639
  %v960 = vpop.f32.mrb[0].mxu0
  %v961 = vadd.f32 %v513, %v960
  %v962 = vpop.f32.mrb[0].mxu0
  %963 = vmatprep.mubr.f32.mxu0 0.0
  %964 = vmatmul.mubr.f32.gmra.mrb[0].mxu0 %v642
  %v965 = vpop.f32.mrb[0].mxu0
  %v966 = vadd.f32 %v514, %v965
  %v967 = vpop.f32.mrb[0].mxu0
  %968 = vmatprep.mubr.f32.mxu0 0.0
  %969 = vmatmul.mubr.f32.gmra.mrb[0].mxu0 %v645
  %v970 = vpop.f32.mrb[0].mxu0
  %v971 = vadd.f32 %v515, %v970
  %v972 = vpop.f32.mrb[0].mxu0
  %973 = vmatprep.mubr.f32.mxu0 0.0
  %974 = vmatmul.mubr.f32.gmra.mrb[0].mxu0 %v648
  %v975 = vpop.f32.mrb[0].mxu0
  %v976 = vadd.f32 %v516, %v975
  %v977 = vpop.f32.mrb[0].mxu0
  %978 = vmatprep.mubr.f32.mxu0 0.0
  %979 = vmatmul.mubr.f32.gmra.mrb[0].mxu0 %v651
  %v980 = vpop.f32.mrb[0].mxu0
  %v981 = vadd.f32 %v517, %v980
  %v982 = vpop.f32.mrb[0].mxu0
  %983 = vmatprep.mubr.f32.mxu0 0.0
  %984 = vmatmul.mubr.f32.gmra.mrb[0].mxu0 %v654
  %v985 = vpop.f32.mrb[0].mxu0
  %v986 = vadd.f32 %v518, %v985
  %v987 = vpop.f32.mrb[0].mxu0
  %988 = vmatprep.mubr.f32.mxu0 0.0
  %989 = vmatmul.mubr.f32.gmra.mrb[0].mxu0 %v657
  %v990 = vpop.f32.mrb[0].mxu0
  %v991 = vadd.f32 %v519, %v990
  %v992 = vpop.f32.mrb[0].mxu0
  %993 = vmatprep.mubr.f32.mxu0 0.0
  %994 = vmatmul.mubr.f32.gmra.mrb[0].mxu0 %v660
  %v995 = vpop.f32.mrb[0].mxu0
  %v996 = vadd.f32 %v520, %v995
  %v997 = vpop.f32.mrb[0].mxu0
  %998 = vmatprep.mubr.f32.mxu0 0.0
  %999 = vmatmul.mubr.f32.gmra.mrb[0].mxu0 %v663
  %v1000 = vpop.f32.mrb[0].mxu0
  %v1001 = vadd.f32 %v521, %v1000
  %v1002 = vpop.f32.mrb[0].mxu0
  %1003 = vmatprep.mubr.f32.mxu0 0.0
  %1004 = vmatmul.mubr.f32.gmra.mrb[0].mxu0 %v666
  %v1005 = vpop.f32.mrb[0].mxu0
  %v1006 = vadd.f32 %v522, %v1005
  %v1007 = vpop.f32.mrb[0].mxu0
  %1008 = vmatprep.mubr.f32.mxu0 0.0
  %1009 = vmatmul.mubr.f32.gmra.mrb[0].mxu0 %v669
  %v1010 = vpop.f32.mrb[0].mxu0
  %v1011 = vadd.f32 %v523, %v1010
  %v1012 = vpop.f32.mrb[0].mxu0
  %1013 = vmatprep.mubr.f32.mxu0 0.0
  %1014 = vmatmul.mubr.f32.gmra.mrb[0].mxu0 %v672
  %v1015 = vpop.f32.mrb[0].mxu0
  %v1016 = vadd.f32 %v524, %v1015
  %v1017 = vpop.f32.mrb[0].mxu0
  %1018 = vmatprep.mubr.f32.mxu0 0.0
  %1019 = vmatmul.mubr.f32.gmra.mrb[0].mxu0 %v675
  %v1020 = vpop.f32.mrb[0].mxu0
  %v1021 = vadd.f32 %v525, %v1020
  %v1022 = vpop.f32.mrb[0].mxu0
  %1023 = vmatprep.mubr.f32.mxu0 0.0
  %1024 = vmatmul.mubr.f32.gmra.mrb[0].mxu0 %v678
  %v1025 = vpop.f32.mrb[0].mxu0
  %v1026 = vadd.f32 %v526, %v1025
  %v1027 = vpop.f32.mrb[0].mxu0
  %1028 = vmatprep.mubr.f32.mxu0 0.0
  %1029 = vmatmul.mubr.f32.gmra.mrb[0].mxu0 %v681
  %v1030 = vpop.f32.mrb[0].mxu0
  %v1031 = vadd.f32 %v527, %v1030
  %v1032 = vpop.f32.mrb[0].mxu0
  %1033 = vmatprep.mubr.f32.mxu0 0.0
  %1034 = vmatmul.mubr.f32.gmra.mrb[0].mxu0 %v684
  %v1035 = vpop.f32.mrb[0].mxu0
  %v1036 = vadd.f32 %v528, %v1035
  %v1037 = vpop.f32.mrb[0].mxu0
  %1038 = vmatprep.mubr.f32.mxu0 0.0
  %1039 = vmatmul.mubr.f32.gmra.mrb[0].mxu0 %v687
  %v1040 = vpop.f32.mrb[0].mxu0
  %v1041 = vadd.f32 %v529, %v1040
  %v1042 = vpop.f32.mrb[0].mxu0
  %1043 = vmatprep.mubr.f32.mxu0 0.0
  %1044 = vmatmul.mubr.f32.gmra.mrb[0].mxu0 %v690
  %v1045 = vpop.f32.mrb[0].mxu0
  %v1046 = vadd.f32 %v530, %v1045
  %v1047 = vpop.f32.mrb[0].mxu0
  %1048 = vmatprep.mubr.f32.mxu0 0.0
  %1049 = vmatmul.mubr.f32.gmra.mrb[0].mxu0 %v693
  %v1050 = vpop.f32.mrb[0].mxu0
  %v1051 = vadd.f32 %v531, %v1050
  %v1052 = vpop.f32.mrb[0].mxu0
  %1053 = vmatprep.mubr.f32.mxu0 0.0
  %1054 = vmatmul.mubr.f32.gmra.mrb[0].mxu0 %v696
  %v1055 = vpop.f32.mrb[0].mxu0
  %v1056 = vadd.f32 %v532, %v1055
  %v1057 = vpop.f32.mrb[0].mxu0
  %1058 = vmatprep.mubr.f32.mxu0 0.0
  %1059 = vmatmul.mubr.f32.gmra.mrb[0].mxu0 %v699
  %v1060 = vpop.f32.mrb[0].mxu0
  %v1061 = vadd.f32 %v533, %v1060
  %v1062 = vpop.f32.mrb[0].mxu0
  %1063 = vmatprep.mubr.f32.mxu0 0.0
  %1064 = vmatmul.mubr.f32.gmra.mrb[0].mxu0 %v702
  %v1065 = vpop.f32.mrb[0].mxu0
  %v1066 = vadd.f32 %v534, %v1065
  %v1067 = vpop.f32.mrb[0].mxu0
  %1068 = vmatprep.mubr.f32.mxu0 0.0
  %1069 = vmatmul.mubr.f32.gmra.mrb[0].mxu0 %v705
  %v1070 = vpop.f32.mrb[0].mxu0
  %v1071 = vadd.f32 %v535, %v1070
  %v1072 = vpop.f32.mrb[0].mxu0
  %1073 = vmatprep.mubr.f32.mxu0 0.0
  %1074 = vmatmul.mubr.f32.gmra.mrb[0].mxu0 %v708
  %v1075 = vpop.f32.mrb[0].mxu0
  %v1076 = vadd.f32 %v536, %v1075
  %v1077 = vpop.f32.mrb[0].mxu0
  %1078 = vmatprep.mubr.f32.mxu0 0.0
  %1079 = vmatmul.mubr.f32.gmra.mrb[0].mxu0 %v711
  %v1080 = vpop.f32.mrb[0].mxu0
  %v1081 = vadd.f32 %v537, %v1080
  %v1082 = vpop.f32.mrb[0].mxu0
  %1083 = vmatprep.mubr.f32.mxu0 0.0
  %1084 = vmatmul.mubr.f32.gmra.mrb[0].mxu0 %v714
  %v1085 = vpop.f32.mrb[0].mxu0
  %v1086 = vadd.f32 %v538, %v1085
  %v1087 = vpop.f32.mrb[0].mxu0
  %1088 = vmatprep.mubr.f32.mxu0 0.0
  %1089 = vmatmul.mubr.f32.gmra.mrb[0].mxu0 %v717
  %v1090 = vpop.f32.mrb[0].mxu0
  %v1091 = vadd.f32 %v539, %v1090
  %v1092 = vpop.f32.mrb[0].mxu0
  %1093 = vmatprep.mubr.f32.mxu0 0.0
  %1094 = vmatmul.mubr.f32.gmra.mrb[0].mxu0 %v720
  %v1095 = vpop.f32.mrb[0].mxu0
  %v1096 = vadd.f32 %v540, %v1095
  %v1097 = vpop.f32.mrb[0].mxu0
  %1098 = vmatprep.mubr.f32.mxu0 0.0
  %1099 = vmatmul.mubr.f32.gmra.mrb[0].mxu0 %v723
  %v1100 = vpop.f32.mrb[0].mxu0
  %v1101 = vadd.f32 %v541, %v1100
  %v1102 = vpop.f32.mrb[0].mxu0
  %1103 = vmatprep.mubr.f32.mxu0 0.0
  %1104 = vmatmul.mubr.f32.gmra.mrb[0].mxu0 %v726
  %v1105 = vpop.f32.mrb[0].mxu0
  %v1106 = vadd.f32 %v542, %v1105
  %v1107 = vpop.f32.mrb[0].mxu0
  %1108 = vmatprep.mubr.f32.mxu0 0.0
  %1109 = vmatmul.mubr.f32.gmra.mrb[0].mxu0 %v729
  %v1110 = vpop.f32.mrb[0].mxu0
  %v1111 = vadd.f32 %v543, %v1110
  %v1112 = vpop.f32.mrb[0].mxu0
  %1113 = vmatprep.mubr.f32.mxu0 0.0
  %1114 = vmatmul.mubr.f32.gmra.mrb[0].mxu0 %v732
  %v1115 = vpop.f32.mrb[0].mxu0
  %v1116 = vadd.f32 %v544, %v1115
  %v1117 = vpop.f32.mrb[0].mxu0
  %1118 = vmatprep.mubr.f32.mxu0 0.0
  %1119 = vmatmul.mubr.f32.gmra.mrb[0].mxu0 %v735
  %v1120 = vpop.f32.mrb[0].mxu0
  %v1121 = vadd.f32 %v545, %v1120
  %v1122 = vpop.f32.mrb[0].mxu0
  %1123 = vmatprep.mubr.f32.mxu0 0.0
  %1124 = vmatmul.mubr.f32.gmra.mrb[0].mxu0 %v738
  %v1125 = vpop.f32.mrb[0].mxu0
  %v1126 = vadd.f32 %v546, %v1125
  %v1127 = vpop.f32.mrb[0].mxu0
  %1128 = vdwg.mxu0
  %1129 = vset.pattern.permute.xlu0 1
  %1130 = vperm.xlu0 %1129, %v94
  %v1131 = vpop.permute.xlu0 %1130
  %1133 = vset.pattern.permute.xlu0 1
  %1134 = vperm.xlu0 %1133, %v95
  %v1135 = vpop.permute.xlu0 %1134
  %1137 = vset.pattern.permute.xlu0 1
  %1138 = vperm.xlu0 %1137, %v96
  %v1139 = vpop.permute.xlu0 %1138
  %1141 = vset.pattern.permute.xlu0 1
  %1142 = vperm.xlu0 %1141, %v97
  %v1143 = vpop.permute.xlu0 %1142
  %1145 = vset.pattern.permute.xlu0 1
  %1146 = vperm.xlu0 %1145, %v98
  %v1147 = vpop.permute.xlu0 %1146
  %1149 = vset.pattern.permute.xlu0 1
  %1150 = vperm.xlu0 %1149, %v99
  %v1151 = vpop.permute.xlu0 %1150
  %1153 = vset.pattern.permute.xlu0 1
  %1154 = vperm.xlu0 %1153, %v100
  %v1155 = vpop.permute.xlu0 %1154
  %1157 = vset.pattern.permute.xlu0 1
  %1158 = vperm.xlu0 %1157, %v101
  %v1159 = vpop.permute.xlu0 %1158
  %1161 = vset.pattern.permute.xlu0 1
  %1162 = vperm.xlu0 %1161, %v102
  %v1163 = vpop.permute.xlu0 %1162
  %1165 = vset.pattern.permute.xlu0 1
  %1166 = vperm.xlu0 %1165, %v103
  %v1167 = vpop.permute.xlu0 %1166
  %1169 = vset.pattern.permute.xlu0 1
  %1170 = vperm.xlu0 %1169, %v104
  %v1171 = vpop.permute.xlu0 %1170
  %1173 = vset.pattern.permute.xlu0 1
  %1174 = vperm.xlu0 %1173, %v105
  %v1175 = vpop.permute.xlu0 %1174
  %1177 = vset.pattern.permute.xlu0 1
  %1178 = vperm.xlu0 %1177, %v106
  %v1179 = vpop.permute.xlu0 %1178
  %1181 = vset.pattern.permute.xlu0 1
  %1182 = vperm.xlu0 %1181, %v107
  %v1183 = vpop.permute.xlu0 %1182
  %1185 = vset.pattern.permute.xlu0 1
  %1186 = vperm.xlu0 %1185, %v108
  %v1187 = vpop.permute.xlu0 %1186
  %1189 = vset.pattern.permute.xlu0 1
  %1190 = vperm.xlu0 %1189, %v109
  %v1191 = vpop.permute.xlu0 %1190
  %1193 = vset.pattern.permute.xlu0 1
  %1194 = vperm.xlu0 %1193, %v110
  %v1195 = vpop.permute.xlu0 %1194
  %1197 = vset.pattern.permute.xlu0 1
  %1198 = vperm.xlu0 %1197, %v111
  %v1199 = vpop.permute.xlu0 %1198
  %1201 = vset.pattern.permute.xlu0 1
  %1202 = vperm.xlu0 %1201, %v112
  %v1203 = vpop.permute.xlu0 %1202
  %1205 = vset.pattern.permute.xlu0 1
  %1206 = vperm.xlu0 %1205, %v113
  %v1207 = vpop.permute.xlu0 %1206
  %1209 = vset.pattern.permute.xlu0 1
  %1210 = vperm.xlu0 %1209, %v114
  %v1211 = vpop.permute.xlu0 %1210
  %1213 = vset.pattern.permute.xlu0 1
  %1214 = vperm.xlu0 %1213, %v115
  %v1215 = vpop.permute.xlu0 %1214
  %1217 = vset.pattern.permute.xlu0 1
  %1218 = vperm.xlu0 %1217, %v116
  %v1219 = vpop.permute.xlu0 %1218
  %1221 = vset.pattern.permute.xlu0 1
  %1222 = vperm.xlu0 %1221, %v117
  %v1223 = vpop.permute.xlu0 %1222
  %1225 = vset.pattern.permute.xlu0 1
  %1226 = vperm.xlu0 %1225, %v118
  %v1227 = vpop.permute.xlu0 %1226
  %1229 = vset.pattern.permute.xlu0 1
  %1230 = vperm.xlu0 %1229, %v119
  %v1231 = vpop.permute.xlu0 %1230
  %1233 = vset.pattern.permute.xlu0 1
  %1234 = vperm.xlu0 %1233, %v120
  %v1235 = vpop.permute.xlu0 %1234
  %1237 = vset.pattern.permute.xlu0 1
  %1238 = vperm.xlu0 %1237, %v121
  %v1239 = vpop.permute.xlu0 %1238
  %1241 = vset.pattern.permute.xlu0 1
  %1242 = vperm.xlu0 %1241, %v122
  %v1243 = vpop.permute.xlu0 %1242
  %1245 = vset.pattern.permute.xlu0 1
  %1246 = vperm.xlu0 %1245, %v123
  %v1247 = vpop.permute.xlu0 %1246
  %1249 = vset.pattern.permute.xlu0 1
  %1250 = vperm.xlu0 %1249, %v124
  %v1251 = vpop.permute.xlu0 %1250
  %1253 = vset.pattern.permute.xlu0 1
  %1254 = vperm.xlu0 %1253, %v125
  %v1255 = vpop.permute.xlu0 %1254
  %1257 = vset.pattern.permute.xlu0 1
  %1258 = vperm.xlu0 %1257, %v126
  %v1259 = vpop.permute.xlu0 %1258
  %1261 = vset.pattern.permute.xlu0 1
  %1262 = vperm.xlu0 %1261, %v127
  %v1263 = vpop.permute.xlu0 %1262
  %1265 = vset.pattern.permute.xlu0 1
  %1266 = vperm.xlu0 %1265, %v128
  %v1267 = vpop.permute.xlu0 %1266
  %1269 = vset.pattern.permute.xlu0 1
  %1270 = vperm.xlu0 %1269, %v129
  %v1271 = vpop.permute.xlu0 %1270
  %1273 = vset.pattern.permute.xlu0 1
  %1274 = vperm.xlu0 %1273, %v130
  %v1275 = vpop.permute.xlu0 %1274
  %1277 = vset.pattern.permute.xlu0 1
  %1278 = vperm.xlu0 %1277, %v131
  %v1279 = vpop.permute.xlu0 %1278
  %1281 = vset.pattern.permute.xlu0 1
  %1282 = vperm.xlu0 %1281, %v132
  %v1283 = vpop.permute.xlu0 %1282
  %1285 = vset.pattern.permute.xlu0 1
  %1286 = vperm.xlu0 %1285, %v133
  %v1287 = vpop.permute.xlu0 %1286
  %1289 = vset.pattern.permute.xlu0 1
  %1290 = vperm.xlu0 %1289, %v134
  %v1291 = vpop.permute.xlu0 %1290
  %1293 = vset.pattern.permute.xlu0 1
  %1294 = vperm.xlu0 %1293, %v135
  %v1295 = vpop.permute.xlu0 %1294
  %1297 = vset.pattern.permute.xlu0 1
  %1298 = vperm.xlu0 %1297, %v136
  %v1299 = vpop.permute.xlu0 %1298
  %1301 = vset.pattern.permute.xlu0 1
  %1302 = vperm.xlu0 %1301, %v137
  %v1303 = vpop.permute.xlu0 %1302
  %1305 = vset.pattern.permute.xlu0 1
  %1306 = vperm.xlu0 %1305, %v138
  %v1307 = vpop.permute.xlu0 %1306
  %1309 = vset.pattern.permute.xlu0 1
  %1310 = vperm.xlu0 %1309, %v139
  %v1311 = vpop.permute.xlu0 %1310
  %1313 = vset.pattern.permute.xlu0 1
  %1314 = vperm.xlu0 %1313, %v140
  %v1315 = vpop.permute.xlu0 %1314
  %1317 = vset.pattern.permute.xlu0 1
  %1318 = vperm.xlu0 %1317, %v141
  %v1319 = vpop.permute.xlu0 %1318
  %1321 = vset.pattern.permute.xlu0 1
  %1322 = vperm.xlu0 %1321, %v142
  %v1323 = vpop.permute.xlu0 %1322
  %1325 = vset.pattern.permute.xlu0 1
  %1326 = vperm.xlu0 %1325, %v143
  %v1327 = vpop.permute.xlu0 %1326
  %1329 = vset.pattern.permute.xlu0 1
  %1330 = vperm.xlu0 %1329, %v144
  %v1331 = vpop.permute.xlu0 %1330
  %1333 = vset.pattern.permute.xlu0 1
  %1334 = vperm.xlu0 %1333, %v145
  %v1335 = vpop.permute.xlu0 %1334
  %1337 = vset.pattern.permute.xlu0 1
  %1338 = vperm.xlu0 %1337, %v146
  %v1339 = vpop.permute.xlu0 %1338
  %1341 = vset.pattern.permute.xlu0 1
  %1342 = vperm.xlu0 %1341, %v147
  %v1343 = vpop.permute.xlu0 %1342
  %1345 = vset.pattern.permute.xlu0 1
  %1346 = vperm.xlu0 %1345, %v148
  %v1347 = vpop.permute.xlu0 %1346
  %1349 = vset.pattern.permute.xlu0 1
  %1350 = vperm.xlu0 %1349, %v149
  %v1351 = vpop.permute.xlu0 %1350
  %1353 = vset.pattern.permute.xlu0 1
  %1354 = vperm.xlu0 %1353, %v150
  %v1355 = vpop.permute.xlu0 %1354
  %1357 = vset.pattern.permute.xlu0 1
  %1358 = vperm.xlu0 %1357, %v151
  %v1359 = vpop.permute.xlu0 %1358
  %1361 = vset.pattern.permute.xlu0 1
  %1362 = vperm.xlu0 %1361, %v152
  %v1363 = vpop.permute.xlu0 %1362
  %1365 = vset.pattern.permute.xlu0 1
  %1366 = vperm.xlu0 %1365, %v153
  %v1367 = vpop.permute.xlu0 %1366
  %1369 = vset.pattern.permute.xlu0 1
  %1370 = vperm.xlu0 %1369, %v154
  %v1371 = vpop.permute.xlu0 %1370
  %1373 = vset.pattern.permute.xlu0 1
  %1374 = vperm.xlu0 %1373, %v155
  %v1375 = vpop.permute.xlu0 %1374
  %1377 = vset.pattern.permute.xlu0 1
  %1378 = vperm.xlu0 %1377, %v156
  %v1379 = vpop.permute.xlu0 %1378
  %1381 = vset.pattern.permute.xlu0 1
  %1382 = vperm.xlu0 %1381, %v157
  %v1383 = vpop.permute.xlu0 %1382
  %v1385 = vlaneseq
  %v1386 = vshrl.u32 %v1385, 7
  %v1387 = vsub.s32 1, %v1386
  %v1388 = vrot.slane %v158, %v1387
  %v1389 = vmul.f32 %v1131, %v1388
  %v1390 = vmul.f32 %v1135, %v1388
  %v1391 = vmul.f32 %v1139, %v1388
  %v1392 = vmul.f32 %v1143, %v1388
  %v1393 = vmul.f32 %v1147, %v1388
  %v1394 = vmul.f32 %v1151, %v1388
  %v1395 = vmul.f32 %v1155, %v1388
  %v1396 = vmul.f32 %v1159, %v1388
  %v1397 = vmul.f32 %v1163, %v1388
  %v1398 = vmul.f32 %v1167, %v1388
  %v1399 = vmul.f32 %v1171, %v1388
  %v1400 = vmul.f32 %v1175, %v1388
  %v1401 = vmul.f32 %v1179, %v1388
  %v1402 = vmul.f32 %v1183, %v1388
  %v1403 = vmul.f32 %v1187, %v1388
  %v1404 = vmul.f32 %v1191, %v1388
  %v1405 = vmul.f32 %v1195, %v1388
  %v1406 = vmul.f32 %v1199, %v1388
  %v1407 = vmul.f32 %v1203, %v1388
  %v1408 = vmul.f32 %v1207, %v1388
  %v1409 = vmul.f32 %v1211, %v1388
  %v1410 = vmul.f32 %v1215, %v1388
  %v1411 = vmul.f32 %v1219, %v1388
  %v1412 = vmul.f32 %v1223, %v1388
  %v1413 = vmul.f32 %v1227, %v1388
  %v1414 = vmul.f32 %v1231, %v1388
  %v1415 = vmul.f32 %v1235, %v1388
  %v1416 = vmul.f32 %v1239, %v1388
  %v1417 = vmul.f32 %v1243, %v1388
  %v1418 = vmul.f32 %v1247, %v1388
  %v1419 = vmul.f32 %v1251, %v1388
  %v1420 = vmul.f32 %v1255, %v1388
  %v1421 = vmul.f32 %v1259, %v1388
  %v1422 = vmul.f32 %v1263, %v1388
  %v1423 = vmul.f32 %v1267, %v1388
  %v1424 = vmul.f32 %v1271, %v1388
  %v1425 = vmul.f32 %v1275, %v1388
  %v1426 = vmul.f32 %v1279, %v1388
  %v1427 = vmul.f32 %v1283, %v1388
  %v1428 = vmul.f32 %v1287, %v1388
  %v1429 = vmul.f32 %v1291, %v1388
  %v1430 = vmul.f32 %v1295, %v1388
  %v1431 = vmul.f32 %v1299, %v1388
  %v1432 = vmul.f32 %v1303, %v1388
  %v1433 = vmul.f32 %v1307, %v1388
  %v1434 = vmul.f32 %v1311, %v1388
  %v1435 = vmul.f32 %v1315, %v1388
  %v1436 = vmul.f32 %v1319, %v1388
  %v1437 = vmul.f32 %v1323, %v1388
  %v1438 = vmul.f32 %v1327, %v1388
  %v1439 = vmul.f32 %v1331, %v1388
  %v1440 = vmul.f32 %v1335, %v1388
  %v1441 = vmul.f32 %v1339, %v1388
  %v1442 = vmul.f32 %v1343, %v1388
  %v1443 = vmul.f32 %v1347, %v1388
  %v1444 = vmul.f32 %v1351, %v1388
  %v1445 = vmul.f32 %v1355, %v1388
  %v1446 = vmul.f32 %v1359, %v1388
  %v1447 = vmul.f32 %v1363, %v1388
  %v1448 = vmul.f32 %v1367, %v1388
  %v1449 = vmul.f32 %v1371, %v1388
  %v1450 = vmul.f32 %v1375, %v1388
  %v1451 = vmul.f32 %v1379, %v1388
  %v1452 = vmul.f32 %v1383, %v1388
  %v1453 = vadd.f32 %v811, %v1389
  %v1454 = vadd.f32 %v816, %v1390
  %v1455 = vadd.f32 %v821, %v1391
  %v1456 = vadd.f32 %v826, %v1392
  %v1457 = vadd.f32 %v831, %v1393
  %v1458 = vadd.f32 %v836, %v1394
  %v1459 = vadd.f32 %v841, %v1395
  %v1460 = vadd.f32 %v846, %v1396
  %v1461 = vadd.f32 %v851, %v1397
  %v1462 = vadd.f32 %v856, %v1398
  %v1463 = vadd.f32 %v861, %v1399
  %v1464 = vadd.f32 %v866, %v1400
  %v1465 = vadd.f32 %v871, %v1401
  %v1466 = vadd.f32 %v876, %v1402
  %v1467 = vadd.f32 %v881, %v1403
  %v1468 = vadd.f32 %v886, %v1404
  %v1469 = vadd.f32 %v891, %v1405
  %v1470 = vadd.f32 %v896, %v1406
  %v1471 = vadd.f32 %v901, %v1407
  %v1472 = vadd.f32 %v906, %v1408
  %v1473 = vadd.f32 %v911, %v1409
  %v1474 = vadd.f32 %v916, %v1410
  %v1475 = vadd.f32 %v921, %v1411
  %v1476 = vadd.f32 %v926, %v1412
  %v1477 = vadd.f32 %v931, %v1413
  %v1478 = vadd.f32 %v936, %v1414
  %v1479 = vadd.f32 %v941, %v1415
  %v1480 = vadd.f32 %v946, %v1416
  %v1481 = vadd.f32 %v951, %v1417
  %v1482 = vadd.f32 %v956, %v1418
  %v1483 = vadd.f32 %v961, %v1419
  %v1484 = vadd.f32 %v966, %v1420
  %v1485 = vadd.f32 %v971, %v1421
  %v1486 = vadd.f32 %v976, %v1422
  %v1487 = vadd.f32 %v981, %v1423
  %v1488 = vadd.f32 %v986, %v1424
  %v1489 = vadd.f32 %v991, %v1425
  %v1490 = vadd.f32 %v996, %v1426
  %v1491 = vadd.f32 %v1001, %v1427
  %v1492 = vadd.f32 %v1006, %v1428
  %v1493 = vadd.f32 %v1011, %v1429
  %v1494 = vadd.f32 %v1016, %v1430
  %v1495 = vadd.f32 %v1021, %v1431
  %v1496 = vadd.f32 %v1026, %v1432
  %v1497 = vadd.f32 %v1031, %v1433
  %v1498 = vadd.f32 %v1036, %v1434
  %v1499 = vadd.f32 %v1041, %v1435
  %v1500 = vadd.f32 %v1046, %v1436
  %v1501 = vadd.f32 %v1051, %v1437
  %v1502 = vadd.f32 %v1056, %v1438
  %v1503 = vadd.f32 %v1061, %v1439
  %v1504 = vadd.f32 %v1066, %v1440
  %v1505 = vadd.f32 %v1071, %v1441
  %v1506 = vadd.f32 %v1076, %v1442
  %v1507 = vadd.f32 %v1081, %v1443
  %v1508 = vadd.f32 %v1086, %v1444
  %v1509 = vadd.f32 %v1091, %v1445
  %v1510 = vadd.f32 %v1096, %v1446
  %v1511 = vadd.f32 %v1101, %v1447
  %v1512 = vadd.f32 %v1106, %v1448
  %v1513 = vadd.f32 %v1111, %v1449
  %v1514 = vadd.f32 %v1116, %v1450
  %v1515 = vadd.f32 %v1121, %v1451
  %v1516 = vadd.f32 %v1126, %v1452
  %v1517 = vld [vmem:[%s4] sm:$0x1]
  %v1519 = vlaneseq
  %v1520 = vshrl.u32 %v1519, 7
  %v1521 = vsub.s32 0, %v1520
  %v1522 = vrot.slane %v1517, %v1521
  %v1524 = vadd.f32 %v1453, %v1522
  %v1525 = vadd.f32 %v1454, %v1522
  %v1526 = vadd.f32 %v1455, %v1522
  %v1527 = vadd.f32 %v1456, %v1522
  %v1528 = vadd.f32 %v1457, %v1522
  %v1529 = vadd.f32 %v1458, %v1522
  %v1530 = vadd.f32 %v1459, %v1522
  %v1531 = vadd.f32 %v1460, %v1522
  %v1532 = vadd.f32 %v1461, %v1522
  %v1533 = vadd.f32 %v1462, %v1522
  %v1534 = vadd.f32 %v1463, %v1522
  %v1535 = vadd.f32 %v1464, %v1522
  %v1536 = vadd.f32 %v1465, %v1522
  %v1537 = vadd.f32 %v1466, %v1522
  %v1538 = vadd.f32 %v1467, %v1522
  %v1539 = vadd.f32 %v1468, %v1522
  %v1540 = vadd.f32 %v1469, %v1522
  %v1541 = vadd.f32 %v1470, %v1522
  %v1542 = vadd.f32 %v1471, %v1522
  %v1543 = vadd.f32 %v1472, %v1522
  %v1544 = vadd.f32 %v1473, %v1522
  %v1545 = vadd.f32 %v1474, %v1522
  %v1546 = vadd.f32 %v1475, %v1522
  %v1547 = vadd.f32 %v1476, %v1522
  %v1548 = vadd.f32 %v1477, %v1522
  %v1549 = vadd.f32 %v1478, %v1522
  %v1550 = vadd.f32 %v1479, %v1522
  %v1551 = vadd.f32 %v1480, %v1522
  %v1552 = vadd.f32 %v1481, %v1522
  %v1553 = vadd.f32 %v1482, %v1522
  %v1554 = vadd.f32 %v1483, %v1522
  %v1555 = vadd.f32 %v1484, %v1522
  %v1556 = vadd.f32 %v1485, %v1522
  %v1557 = vadd.f32 %v1486, %v1522
  %v1558 = vadd.f32 %v1487, %v1522
  %v1559 = vadd.f32 %v1488, %v1522
  %v1560 = vadd.f32 %v1489, %v1522
  %v1561 = vadd.f32 %v1490, %v1522
  %v1562 = vadd.f32 %v1491, %v1522
  %v1563 = vadd.f32 %v1492, %v1522
  %v1564 = vadd.f32 %v1493, %v1522
  %v1565 = vadd.f32 %v1494, %v1522
  %v1566 = vadd.f32 %v1495, %v1522
  %v1567 = vadd.f32 %v1496, %v1522
  %v1568 = vadd.f32 %v1497, %v1522
  %v1569 = vadd.f32 %v1498, %v1522
  %v1570 = vadd.f32 %v1499, %v1522
  %v1571 = vadd.f32 %v1500, %v1522
  %v1572 = vadd.f32 %v1501, %v1522
  %v1573 = vadd.f32 %v1502, %v1522
  %v1574 = vadd.f32 %v1503, %v1522
  %v1575 = vadd.f32 %v1504, %v1522
  %v1576 = vadd.f32 %v1505, %v1522
  %v1577 = vadd.f32 %v1506, %v1522
  %v1578 = vadd.f32 %v1507, %v1522
  %v1579 = vadd.f32 %v1508, %v1522
  %v1580 = vadd.f32 %v1509, %v1522
  %v1581 = vadd.f32 %v1510, %v1522
  %v1582 = vadd.f32 %v1511, %v1522
  %v1583 = vadd.f32 %v1512, %v1522
  %v1584 = vadd.f32 %v1513, %v1522
  %v1585 = vadd.f32 %v1514, %v1522
  %v1586 = vadd.f32 %v1515, %v1522
  %v1587 = vadd.f32 %v1516, %v1522
  %v1588 = vmax.f32 %v1524, 0.0
  %v1589 = vmax.f32 %v1525, 0.0
  %v1590 = vmax.f32 %v1526, 0.0
  %v1591 = vmax.f32 %v1527, 0.0
  %v1592 = vmax.f32 %v1528, 0.0
  %v1593 = vmax.f32 %v1529, 0.0
  %v1594 = vmax.f32 %v1530, 0.0
  %v1595 = vmax.f32 %v1531, 0.0
  %v1596 = vmax.f32 %v1532, 0.0
  %v1597 = vmax.f32 %v1533, 0.0
  %v1598 = vmax.f32 %v1534, 0.0
  %v1599 = vmax.f32 %v1535, 0.0
  %v1600 = vmax.f32 %v1536, 0.0
  %v1601 = vmax.f32 %v1537, 0.0
  %v1602 = vmax.f32 %v1538, 0.0
  %v1603 = vmax.f32 %v1539, 0.0
  %v1604 = vmax.f32 %v1540, 0.0
  %v1605 = vmax.f32 %v1541, 0.0
  %v1606 = vmax.f32 %v1542, 0.0
  %v1607 = vmax.f32 %v1543, 0.0
  %v1608 = vmax.f32 %v1544, 0.0
  %v1609 = vmax.f32 %v1545, 0.0
  %v1610 = vmax.f32 %v1546, 0.0
  %v1611 = vmax.f32 %v1547, 0.0
  %v1612 = vmax.f32 %v1548, 0.0
  %v1613 = vmax.f32 %v1549, 0.0
  %v1614 = vmax.f32 %v1550, 0.0
  %v1615 = vmax.f32 %v1551, 0.0
  %v1616 = vmax.f32 %v1552, 0.0
  %v1617 = vmax.f32 %v1553, 0.0
  %v1618 = vmax.f32 %v1554, 0.0
  %v1619 = vmax.f32 %v1555, 0.0
  %v1620 = vmax.f32 %v1556, 0.0
  %v1621 = vmax.f32 %v1557, 0.0
  %v1622 = vmax.f32 %v1558, 0.0
  %v1623 = vmax.f32 %v1559, 0.0
  %v1624 = vmax.f32 %v1560, 0.0
  %v1625 = vmax.f32 %v1561, 0.0
  %v1626 = vmax.f32 %v1562, 0.0
  %v1627 = vmax.f32 %v1563, 0.0
  %v1628 = vmax.f32 %v1564, 0.0
  %v1629 = vmax.f32 %v1565, 0.0
  %v1630 = vmax.f32 %v1566, 0.0
  %v1631 = vmax.f32 %v1567, 0.0
  %v1632 = vmax.f32 %v1568, 0.0
  %v1633 = vmax.f32 %v1569, 0.0
  %v1634 = vmax.f32 %v1570, 0.0
  %v1635 = vmax.f32 %v1571, 0.0
  %v1636 = vmax.f32 %v1572, 0.0
  %v1637 = vmax.f32 %v1573, 0.0
  %v1638 = vmax.f32 %v1574, 0.0
  %v1639 = vmax.f32 %v1575, 0.0
  %v1640 = vmax.f32 %v1576, 0.0
  %v1641 = vmax.f32 %v1577, 0.0
  %v1642 = vmax.f32 %v1578, 0.0
  %v1643 = vmax.f32 %v1579, 0.0
  %v1644 = vmax.f32 %v1580, 0.0
  %v1645 = vmax.f32 %v1581, 0.0
  %v1646 = vmax.f32 %v1582, 0.0
  %v1647 = vmax.f32 %v1583, 0.0
  %v1648 = vmax.f32 %v1584, 0.0
  %v1649 = vmax.f32 %v1585, 0.0
  %v1650 = vmax.f32 %v1586, 0.0
  %v1651 = vmax.f32 %v1587, 0.0
  %v1652 = vld [vmem:[%s5] sm:$0xff]
  %v1653 = vld [vmem:[%s5 + $0x8] sm:$0xff]
  %v1654 = vld [vmem:[%s5 + $0x10] sm:$0xff]
  %v1655 = vld [vmem:[%s5 + $0x18] sm:$0xff]
  %v1656 = vld [vmem:[%s6] sm:$0x1]
  %v1658 = vlaneseq
  %v1659 = vshrl.u32 %v1658, 7
  %v1660 = vsub.s32 0, %v1659
  %v1661 = vrot.slane %v1656, %v1660
  %vm1663 = vcmask 261120
  %v1665 = vsel %vm1663, %v1588, 0
  %v1668 = vsel %vm1663, %v1589, 0
  %v1671 = vsel %vm1663, %v1590, 0
  %v1674 = vsel %vm1663, %v1591, 0
  %v1677 = vsel %vm1663, %v1592, 0
  %v1680 = vsel %vm1663, %v1593, 0
  %v1683 = vsel %vm1663, %v1594, 0
  %v1686 = vsel %vm1663, %v1595, 0
  %v1689 = vsel %vm1663, %v1596, 0
  %v1692 = vsel %vm1663, %v1597, 0
  %v1695 = vsel %vm1663, %v1598, 0
  %v1698 = vsel %vm1663, %v1599, 0
  %v1701 = vsel %vm1663, %v1600, 0
  %v1704 = vsel %vm1663, %v1601, 0
  %v1707 = vsel %vm1663, %v1602, 0
  %v1710 = vsel %vm1663, %v1603, 0
  %v1713 = vsel %vm1663, %v1604, 0
  %v1716 = vsel %vm1663, %v1605, 0
  %v1719 = vsel %vm1663, %v1606, 0
  %v1722 = vsel %vm1663, %v1607, 0
  %v1725 = vsel %vm1663, %v1608, 0
  %v1728 = vsel %vm1663, %v1609, 0
  %v1731 = vsel %vm1663, %v1610, 0
  %v1734 = vsel %vm1663, %v1611, 0
  %v1737 = vsel %vm1663, %v1612, 0
  %v1740 = vsel %vm1663, %v1613, 0
  %v1743 = vsel %vm1663, %v1614, 0
  %v1746 = vsel %vm1663, %v1615, 0
  %v1749 = vsel %vm1663, %v1616, 0
  %v1752 = vsel %vm1663, %v1617, 0
  %v1755 = vsel %vm1663, %v1618, 0
  %v1758 = vsel %vm1663, %v1619, 0
  %v1761 = vsel %vm1663, %v1620, 0
  %v1764 = vsel %vm1663, %v1621, 0
  %v1767 = vsel %vm1663, %v1622, 0
  %v1770 = vsel %vm1663, %v1623, 0
  %v1773 = vsel %vm1663, %v1624, 0
  %v1776 = vsel %vm1663, %v1625, 0
  %v1779 = vsel %vm1663, %v1626, 0
  %v1782 = vsel %vm1663, %v1627, 0
  %v1785 = vsel %vm1663, %v1628, 0
  %v1788 = vsel %vm1663, %v1629, 0
  %v1791 = vsel %vm1663, %v1630, 0
  %v1794 = vsel %vm1663, %v1631, 0
  %v1797 = vsel %vm1663, %v1632, 0
  %v1800 = vsel %vm1663, %v1633, 0
  %v1803 = vsel %vm1663, %v1634, 0
  %v1806 = vsel %vm1663, %v1635, 0
  %v1809 = vsel %vm1663, %v1636, 0
  %v1812 = vsel %vm1663, %v1637, 0
  %v1815 = vsel %vm1663, %v1638, 0
  %v1818 = vsel %vm1663, %v1639, 0
  %v1821 = vsel %vm1663, %v1640, 0
  %v1824 = vsel %vm1663, %v1641, 0
  %v1827 = vsel %vm1663, %v1642, 0
  %v1830 = vsel %vm1663, %v1643, 0
  %v1833 = vsel %vm1663, %v1644, 0
  %v1836 = vsel %vm1663, %v1645, 0
  %v1839 = vsel %vm1663, %v1646, 0
  %v1842 = vsel %vm1663, %v1647, 0
  %v1845 = vsel %vm1663, %v1648, 0
  %v1848 = vsel %vm1663, %v1649, 0
  %v1851 = vsel %vm1663, %v1650, 0
  %v1854 = vsel %vm1663, %v1651, 0
  %1856 = vmatprep.subr.mxu0 0.0
  %1857 = vmatpush1.msra.mxu0 %v1652
  %1858 = vmatprep.subr.mxu0 0.0
  %1859 = vmatpush1.msra.mxu0 %v1653
  %1860 = vmatprep.subr.mxu0 0.0
  %1861 = vmatpush1.msra.mxu0 %v1654
  %1862 = vmatprep.subr.mxu0 0.0
  %1863 = vmatpush1.msra.mxu0 %v1655
  %1864 = vmatprep.subr.mxu0 0.0
  %1865 = vmatpush1.msra.mxu0 0.0
  %1866 = vmatprep.subr.mxu0 0.0
  %1867 = vmatpush1.msra.mxu0 0.0
  %1868 = vmatprep.subr.mxu0 0.0
  %1869 = vmatpush1.msra.mxu0 0.0
  %1870 = vmatprep.subr.mxu0 0.0
  %1871 = vmatpush1.msra.mxu0 0.0
  %1872 = vmatprep.subr.mxu0 0.0
  %1873 = vmatpush1.msra.mxu0 0.0
  %1874 = vmatprep.subr.mxu0 0.0
  %1875 = vmatpush1.msra.mxu0 0.0
  %1876 = vmatprep.subr.mxu0 0.0
  %1877 = vmatpush1.msra.mxu0 0.0
  %1878 = vmatprep.subr.mxu0 0.0
  %1879 = vmatpush1.msra.mxu0 0.0
  %1880 = vmatprep.subr.mxu0 0.0
  %1881 = vmatpush1.msra.mxu0 0.0
  %1882 = vmatprep.subr.mxu0 0.0
  %1883 = vmatpush1.msra.mxu0 0.0
  %1884 = vmatprep.subr.mxu0 0.0
  %1885 = vmatpush1.msra.mxu0 0.0
  %1886 = vmatprep.subr.mxu0 0.0
  %1887 = vmatpush1.msra.mxu0 0.0
  %1888 = vmatprep.subr.mxu0 0.0
  %1889 = vmatpush1.msra.mxu0 0.0
  %1890 = vmatprep.subr.mxu0 0.0
  %1891 = vmatpush1.msra.mxu0 0.0
  %1892 = vmatprep.subr.mxu0 0.0
  %1893 = vmatpush1.msra.mxu0 0.0
  %1894 = vmatprep.subr.mxu0 0.0
  %1895 = vmatpush1.msra.mxu0 0.0
  %1896 = vmatprep.subr.mxu0 0.0
  %1897 = vmatpush1.msra.mxu0 0.0
  %1898 = vmatprep.subr.mxu0 0.0
  %1899 = vmatpush1.msra.mxu0 0.0
  %1900 = vmatprep.subr.mxu0 0.0
  %1901 = vmatpush1.msra.mxu0 0.0
  %1902 = vmatprep.subr.mxu0 0.0
  %1903 = vmatpush1.msra.mxu0 0.0
  %1904 = vmatprep.subr.mxu0 0.0
  %1905 = vmatpush1.msra.mxu0 0.0
  %1906 = vmatprep.subr.mxu0 0.0
  %1907 = vmatpush1.msra.mxu0 0.0
  %1908 = vmatprep.subr.mxu0 0.0
  %1909 = vmatpush1.msra.mxu0 0.0
  %1910 = vmatprep.subr.mxu0 0.0
  %1911 = vmatpush1.msra.mxu0 0.0
  %1912 = vmatprep.subr.mxu0 0.0
  %1913 = vmatpush1.msra.mxu0 0.0
  %1914 = vmatprep.subr.mxu0 0.0
  %1915 = vmatpush1.msra.mxu0 0.0
  %1916 = vmatprep.subr.mxu0 0.0
  %1917 = vmatpush1.msra.mxu0 0.0
  %1918 = vmatprep.subr.mxu0 0.0
  %1919 = vmatpush1.msra.mxu0 0.0
  %1920 = vmatprep.mubr.f32.mxu0 0.0
  %1921 = vmatmul.mubr.f32.gmra.mrb[0].mxu0 %v1665
  %v1922 = vpop.f32.mrb[0].mxu0
  %v1923 = vadd.f32 %v1661, %v1922
  %v1924 = vpop.f32.mrb[0].mxu0
  %1925 = vmatprep.mubr.f32.mxu0 0.0
  %1926 = vmatmul.mubr.f32.gmra.mrb[0].mxu0 %v1668
  %v1927 = vpop.f32.mrb[0].mxu0
  %v1928 = vadd.f32 %v1661, %v1927
  %v1929 = vpop.f32.mrb[0].mxu0
  %1930 = vmatprep.mubr.f32.mxu0 0.0
  %1931 = vmatmul.mubr.f32.gmra.mrb[0].mxu0 %v1671
  %v1932 = vpop.f32.mrb[0].mxu0
  %v1933 = vadd.f32 %v1661, %v1932
  %v1934 = vpop.f32.mrb[0].mxu0
  %1935 = vmatprep.mubr.f32.mxu0 0.0
  %1936 = vmatmul.mubr.f32.gmra.mrb[0].mxu0 %v1674
  %v1937 = vpop.f32.mrb[0].mxu0
  %v1938 = vadd.f32 %v1661, %v1937
  %v1939 = vpop.f32.mrb[0].mxu0
  %1940 = vmatprep.mubr.f32.mxu0 0.0
  %1941 = vmatmul.mubr.f32.gmra.mrb[0].mxu0 %v1677
  %v1942 = vpop.f32.mrb[0].mxu0
  %v1943 = vadd.f32 %v1661, %v1942
  %v1944 = vpop.f32.mrb[0].mxu0
  %1945 = vmatprep.mubr.f32.mxu0 0.0
  %1946 = vmatmul.mubr.f32.gmra.mrb[0].mxu0 %v1680
  %v1947 = vpop.f32.mrb[0].mxu0
  %v1948 = vadd.f32 %v1661, %v1947
  %v1949 = vpop.f32.mrb[0].mxu0
  %1950 = vmatprep.mubr.f32.mxu0 0.0
  %1951 = vmatmul.mubr.f32.gmra.mrb[0].mxu0 %v1683
  %v1952 = vpop.f32.mrb[0].mxu0
  %v1953 = vadd.f32 %v1661, %v1952
  %v1954 = vpop.f32.mrb[0].mxu0
  %1955 = vmatprep.mubr.f32.mxu0 0.0
  %1956 = vmatmul.mubr.f32.gmra.mrb[0].mxu0 %v1686
  %v1957 = vpop.f32.mrb[0].mxu0
  %v1958 = vadd.f32 %v1661, %v1957
  %v1959 = vpop.f32.mrb[0].mxu0
  %1960 = vmatprep.mubr.f32.mxu0 0.0
  %1961 = vmatmul.mubr.f32.gmra.mrb[0].mxu0 %v1689
  %v1962 = vpop.f32.mrb[0].mxu0
  %v1963 = vadd.f32 %v1661, %v1962
  %v1964 = vpop.f32.mrb[0].mxu0
  %1965 = vmatprep.mubr.f32.mxu0 0.0
  %1966 = vmatmul.mubr.f32.gmra.mrb[0].mxu0 %v1692
  %v1967 = vpop.f32.mrb[0].mxu0
  %v1968 = vadd.f32 %v1661, %v1967
  %v1969 = vpop.f32.mrb[0].mxu0
  %1970 = vmatprep.mubr.f32.mxu0 0.0
  %1971 = vmatmul.mubr.f32.gmra.mrb[0].mxu0 %v1695
  %v1972 = vpop.f32.mrb[0].mxu0
  %v1973 = vadd.f32 %v1661, %v1972
  %v1974 = vpop.f32.mrb[0].mxu0
  %1975 = vmatprep.mubr.f32.mxu0 0.0
  %1976 = vmatmul.mubr.f32.gmra.mrb[0].mxu0 %v1698
  %v1977 = vpop.f32.mrb[0].mxu0
  %v1978 = vadd.f32 %v1661, %v1977
  %v1979 = vpop.f32.mrb[0].mxu0
  %1980 = vmatprep.mubr.f32.mxu0 0.0
  %1981 = vmatmul.mubr.f32.gmra.mrb[0].mxu0 %v1701
  %v1982 = vpop.f32.mrb[0].mxu0
  %v1983 = vadd.f32 %v1661, %v1982
  %v1984 = vpop.f32.mrb[0].mxu0
  %1985 = vmatprep.mubr.f32.mxu0 0.0
  %1986 = vmatmul.mubr.f32.gmra.mrb[0].mxu0 %v1704
  %v1987 = vpop.f32.mrb[0].mxu0
  %v1988 = vadd.f32 %v1661, %v1987
  %v1989 = vpop.f32.mrb[0].mxu0
  %1990 = vmatprep.mubr.f32.mxu0 0.0
  %1991 = vmatmul.mubr.f32.gmra.mrb[0].mxu0 %v1707
  %v1992 = vpop.f32.mrb[0].mxu0
  %v1993 = vadd.f32 %v1661, %v1992
  %v1994 = vpop.f32.mrb[0].mxu0
  %1995 = vmatprep.mubr.f32.mxu0 0.0
  %1996 = vmatmul.mubr.f32.gmra.mrb[0].mxu0 %v1710
  %v1997 = vpop.f32.mrb[0].mxu0
  %v1998 = vadd.f32 %v1661, %v1997
  %v1999 = vpop.f32.mrb[0].mxu0
  %2000 = vmatprep.mubr.f32.mxu0 0.0
  %2001 = vmatmul.mubr.f32.gmra.mrb[0].mxu0 %v1713
  %v2002 = vpop.f32.mrb[0].mxu0
  %v2003 = vadd.f32 %v1661, %v2002
  %v2004 = vpop.f32.mrb[0].mxu0
  %2005 = vmatprep.mubr.f32.mxu0 0.0
  %2006 = vmatmul.mubr.f32.gmra.mrb[0].mxu0 %v1716
  %v2007 = vpop.f32.mrb[0].mxu0
  %v2008 = vadd.f32 %v1661, %v2007
  %v2009 = vpop.f32.mrb[0].mxu0
  %2010 = vmatprep.mubr.f32.mxu0 0.0
  %2011 = vmatmul.mubr.f32.gmra.mrb[0].mxu0 %v1719
  %v2012 = vpop.f32.mrb[0].mxu0
  %v2013 = vadd.f32 %v1661, %v2012
  %v2014 = vpop.f32.mrb[0].mxu0
  %2015 = vmatprep.mubr.f32.mxu0 0.0
  %2016 = vmatmul.mubr.f32.gmra.mrb[0].mxu0 %v1722
  %v2017 = vpop.f32.mrb[0].mxu0
  %v2018 = vadd.f32 %v1661, %v2017
  %v2019 = vpop.f32.mrb[0].mxu0
  %2020 = vmatprep.mubr.f32.mxu0 0.0
  %2021 = vmatmul.mubr.f32.gmra.mrb[0].mxu0 %v1725
  %v2022 = vpop.f32.mrb[0].mxu0
  %v2023 = vadd.f32 %v1661, %v2022
  %v2024 = vpop.f32.mrb[0].mxu0
  %2025 = vmatprep.mubr.f32.mxu0 0.0
  %2026 = vmatmul.mubr.f32.gmra.mrb[0].mxu0 %v1728
  %v2027 = vpop.f32.mrb[0].mxu0
  %v2028 = vadd.f32 %v1661, %v2027
  %v2029 = vpop.f32.mrb[0].mxu0
  %2030 = vmatprep.mubr.f32.mxu0 0.0
  %2031 = vmatmul.mubr.f32.gmra.mrb[0].mxu0 %v1731
  %v2032 = vpop.f32.mrb[0].mxu0
  %v2033 = vadd.f32 %v1661, %v2032
  %v2034 = vpop.f32.mrb[0].mxu0
  %2035 = vmatprep.mubr.f32.mxu0 0.0
  %2036 = vmatmul.mubr.f32.gmra.mrb[0].mxu0 %v1734
  %v2037 = vpop.f32.mrb[0].mxu0
  %v2038 = vadd.f32 %v1661, %v2037
  %v2039 = vpop.f32.mrb[0].mxu0
  %2040 = vmatprep.mubr.f32.mxu0 0.0
  %2041 = vmatmul.mubr.f32.gmra.mrb[0].mxu0 %v1737
  %v2042 = vpop.f32.mrb[0].mxu0
  %v2043 = vadd.f32 %v1661, %v2042
  %v2044 = vpop.f32.mrb[0].mxu0
  %2045 = vmatprep.mubr.f32.mxu0 0.0
  %2046 = vmatmul.mubr.f32.gmra.mrb[0].mxu0 %v1740
  %v2047 = vpop.f32.mrb[0].mxu0
  %v2048 = vadd.f32 %v1661, %v2047
  %v2049 = vpop.f32.mrb[0].mxu0
  %2050 = vmatprep.mubr.f32.mxu0 0.0
  %2051 = vmatmul.mubr.f32.gmra.mrb[0].mxu0 %v1743
  %v2052 = vpop.f32.mrb[0].mxu0
  %v2053 = vadd.f32 %v1661, %v2052
  %v2054 = vpop.f32.mrb[0].mxu0
  %2055 = vmatprep.mubr.f32.mxu0 0.0
  %2056 = vmatmul.mubr.f32.gmra.mrb[0].mxu0 %v1746
  %v2057 = vpop.f32.mrb[0].mxu0
  %v2058 = vadd.f32 %v1661, %v2057
  %v2059 = vpop.f32.mrb[0].mxu0
  %2060 = vmatprep.mubr.f32.mxu0 0.0
  %2061 = vmatmul.mubr.f32.gmra.mrb[0].mxu0 %v1749
  %v2062 = vpop.f32.mrb[0].mxu0
  %v2063 = vadd.f32 %v1661, %v2062
  %v2064 = vpop.f32.mrb[0].mxu0
  %2065 = vmatprep.mubr.f32.mxu0 0.0
  %2066 = vmatmul.mubr.f32.gmra.mrb[0].mxu0 %v1752
  %v2067 = vpop.f32.mrb[0].mxu0
  %v2068 = vadd.f32 %v1661, %v2067
  %v2069 = vpop.f32.mrb[0].mxu0
  %2070 = vmatprep.mubr.f32.mxu0 0.0
  %2071 = vmatmul.mubr.f32.gmra.mrb[0].mxu0 %v1755
  %v2072 = vpop.f32.mrb[0].mxu0
  %v2073 = vadd.f32 %v1661, %v2072
  %v2074 = vpop.f32.mrb[0].mxu0
  %2075 = vmatprep.mubr.f32.mxu0 0.0
  %2076 = vmatmul.mubr.f32.gmra.mrb[0].mxu0 %v1758
  %v2077 = vpop.f32.mrb[0].mxu0
  %v2078 = vadd.f32 %v1661, %v2077
  %v2079 = vpop.f32.mrb[0].mxu0
  %2080 = vmatprep.mubr.f32.mxu0 0.0
  %2081 = vmatmul.mubr.f32.gmra.mrb[0].mxu0 %v1761
  %v2082 = vpop.f32.mrb[0].mxu0
  %v2083 = vadd.f32 %v1661, %v2082
  %v2084 = vpop.f32.mrb[0].mxu0
  %2085 = vmatprep.mubr.f32.mxu0 0.0
  %2086 = vmatmul.mubr.f32.gmra.mrb[0].mxu0 %v1764
  %v2087 = vpop.f32.mrb[0].mxu0
  %v2088 = vadd.f32 %v1661, %v2087
  %v2089 = vpop.f32.mrb[0].mxu0
  %2090 = vmatprep.mubr.f32.mxu0 0.0
  %2091 = vmatmul.mubr.f32.gmra.mrb[0].mxu0 %v1767
  %v2092 = vpop.f32.mrb[0].mxu0
  %v2093 = vadd.f32 %v1661, %v2092
  %v2094 = vpop.f32.mrb[0].mxu0
  %2095 = vmatprep.mubr.f32.mxu0 0.0
  %2096 = vmatmul.mubr.f32.gmra.mrb[0].mxu0 %v1770
  %v2097 = vpop.f32.mrb[0].mxu0
  %v2098 = vadd.f32 %v1661, %v2097
  %v2099 = vpop.f32.mrb[0].mxu0
  %2100 = vmatprep.mubr.f32.mxu0 0.0
  %2101 = vmatmul.mubr.f32.gmra.mrb[0].mxu0 %v1773
  %v2102 = vpop.f32.mrb[0].mxu0
  %v2103 = vadd.f32 %v1661, %v2102
  %v2104 = vpop.f32.mrb[0].mxu0
  %2105 = vmatprep.mubr.f32.mxu0 0.0
  %2106 = vmatmul.mubr.f32.gmra.mrb[0].mxu0 %v1776
  %v2107 = vpop.f32.mrb[0].mxu0
  %v2108 = vadd.f32 %v1661, %v2107
  %v2109 = vpop.f32.mrb[0].mxu0
  %2110 = vmatprep.mubr.f32.mxu0 0.0
  %2111 = vmatmul.mubr.f32.gmra.mrb[0].mxu0 %v1779
  %v2112 = vpop.f32.mrb[0].mxu0
  %v2113 = vadd.f32 %v1661, %v2112
  %v2114 = vpop.f32.mrb[0].mxu0
  %2115 = vmatprep.mubr.f32.mxu0 0.0
  %2116 = vmatmul.mubr.f32.gmra.mrb[0].mxu0 %v1782
  %v2117 = vpop.f32.mrb[0].mxu0
  %v2118 = vadd.f32 %v1661, %v2117
  %v2119 = vpop.f32.mrb[0].mxu0
  %2120 = vmatprep.mubr.f32.mxu0 0.0
  %2121 = vmatmul.mubr.f32.gmra.mrb[0].mxu0 %v1785
  %v2122 = vpop.f32.mrb[0].mxu0
  %v2123 = vadd.f32 %v1661, %v2122
  %v2124 = vpop.f32.mrb[0].mxu0
  %2125 = vmatprep.mubr.f32.mxu0 0.0
  %2126 = vmatmul.mubr.f32.gmra.mrb[0].mxu0 %v1788
  %v2127 = vpop.f32.mrb[0].mxu0
  %v2128 = vadd.f32 %v1661, %v2127
  %v2129 = vpop.f32.mrb[0].mxu0
  %2130 = vmatprep.mubr.f32.mxu0 0.0
  %2131 = vmatmul.mubr.f32.gmra.mrb[0].mxu0 %v1791
  %v2132 = vpop.f32.mrb[0].mxu0
  %v2133 = vadd.f32 %v1661, %v2132
  %v2134 = vpop.f32.mrb[0].mxu0
  %2135 = vmatprep.mubr.f32.mxu0 0.0
  %2136 = vmatmul.mubr.f32.gmra.mrb[0].mxu0 %v1794
  %v2137 = vpop.f32.mrb[0].mxu0
  %v2138 = vadd.f32 %v1661, %v2137
  %v2139 = vpop.f32.mrb[0].mxu0
  %2140 = vmatprep.mubr.f32.mxu0 0.0
  %2141 = vmatmul.mubr.f32.gmra.mrb[0].mxu0 %v1797
  %v2142 = vpop.f32.mrb[0].mxu0
  %v2143 = vadd.f32 %v1661, %v2142
  %v2144 = vpop.f32.mrb[0].mxu0
  %2145 = vmatprep.mubr.f32.mxu0 0.0
  %2146 = vmatmul.mubr.f32.gmra.mrb[0].mxu0 %v1800
  %v2147 = vpop.f32.mrb[0].mxu0
  %v2148 = vadd.f32 %v1661, %v2147
  %v2149 = vpop.f32.mrb[0].mxu0
  %2150 = vmatprep.mubr.f32.mxu0 0.0
  %2151 = vmatmul.mubr.f32.gmra.mrb[0].mxu0 %v1803
  %v2152 = vpop.f32.mrb[0].mxu0
  %v2153 = vadd.f32 %v1661, %v2152
  %v2154 = vpop.f32.mrb[0].mxu0
  %2155 = vmatprep.mubr.f32.mxu0 0.0
  %2156 = vmatmul.mubr.f32.gmra.mrb[0].mxu0 %v1806
  %v2157 = vpop.f32.mrb[0].mxu0
  %v2158 = vadd.f32 %v1661, %v2157
  %v2159 = vpop.f32.mrb[0].mxu0
  %2160 = vmatprep.mubr.f32.mxu0 0.0
  %2161 = vmatmul.mubr.f32.gmra.mrb[0].mxu0 %v1809
  %v2162 = vpop.f32.mrb[0].mxu0
  %v2163 = vadd.f32 %v1661, %v2162
  %v2164 = vpop.f32.mrb[0].mxu0
  %2165 = vmatprep.mubr.f32.mxu0 0.0
  %2166 = vmatmul.mubr.f32.gmra.mrb[0].mxu0 %v1812
  %v2167 = vpop.f32.mrb[0].mxu0
  %v2168 = vadd.f32 %v1661, %v2167
  %v2169 = vpop.f32.mrb[0].mxu0
  %2170 = vmatprep.mubr.f32.mxu0 0.0
  %2171 = vmatmul.mubr.f32.gmra.mrb[0].mxu0 %v1815
  %v2172 = vpop.f32.mrb[0].mxu0
  %v2173 = vadd.f32 %v1661, %v2172
  %v2174 = vpop.f32.mrb[0].mxu0
  %2175 = vmatprep.mubr.f32.mxu0 0.0
  %2176 = vmatmul.mubr.f32.gmra.mrb[0].mxu0 %v1818
  %v2177 = vpop.f32.mrb[0].mxu0
  %v2178 = vadd.f32 %v1661, %v2177
  %v2179 = vpop.f32.mrb[0].mxu0
  %2180 = vmatprep.mubr.f32.mxu0 0.0
  %2181 = vmatmul.mubr.f32.gmra.mrb[0].mxu0 %v1821
  %v2182 = vpop.f32.mrb[0].mxu0
  %v2183 = vadd.f32 %v1661, %v2182
  %v2184 = vpop.f32.mrb[0].mxu0
  %2185 = vmatprep.mubr.f32.mxu0 0.0
  %2186 = vmatmul.mubr.f32.gmra.mrb[0].mxu0 %v1824
  %v2187 = vpop.f32.mrb[0].mxu0
  %v2188 = vadd.f32 %v1661, %v2187
  %v2189 = vpop.f32.mrb[0].mxu0
  %2190 = vmatprep.mubr.f32.mxu0 0.0
  %2191 = vmatmul.mubr.f32.gmra.mrb[0].mxu0 %v1827
  %v2192 = vpop.f32.mrb[0].mxu0
  %v2193 = vadd.f32 %v1661, %v2192
  %v2194 = vpop.f32.mrb[0].mxu0
  %2195 = vmatprep.mubr.f32.mxu0 0.0
  %2196 = vmatmul.mubr.f32.gmra.mrb[0].mxu0 %v1830
  %v2197 = vpop.f32.mrb[0].mxu0
  %v2198 = vadd.f32 %v1661, %v2197
  %v2199 = vpop.f32.mrb[0].mxu0
  %2200 = vmatprep.mubr.f32.mxu0 0.0
  %2201 = vmatmul.mubr.f32.gmra.mrb[0].mxu0 %v1833
  %v2202 = vpop.f32.mrb[0].mxu0
  %v2203 = vadd.f32 %v1661, %v2202
  %v2204 = vpop.f32.mrb[0].mxu0
  %2205 = vmatprep.mubr.f32.mxu0 0.0
  %2206 = vmatmul.mubr.f32.gmra.mrb[0].mxu0 %v1836
  %v2207 = vpop.f32.mrb[0].mxu0
  %v2208 = vadd.f32 %v1661, %v2207
  %v2209 = vpop.f32.mrb[0].mxu0
  %2210 = vmatprep.mubr.f32.mxu0 0.0
  %2211 = vmatmul.mubr.f32.gmra.mrb[0].mxu0 %v1839
  %v2212 = vpop.f32.mrb[0].mxu0
  %v2213 = vadd.f32 %v1661, %v2212
  %v2214 = vpop.f32.mrb[0].mxu0
  %2215 = vmatprep.mubr.f32.mxu0 0.0
  %2216 = vmatmul.mubr.f32.gmra.mrb[0].mxu0 %v1842
  %v2217 = vpop.f32.mrb[0].mxu0
  %v2218 = vadd.f32 %v1661, %v2217
  %v2219 = vpop.f32.mrb[0].mxu0
  %2220 = vmatprep.mubr.f32.mxu0 0.0
  %2221 = vmatmul.mubr.f32.gmra.mrb[0].mxu0 %v1845
  %v2222 = vpop.f32.mrb[0].mxu0
  %v2223 = vadd.f32 %v1661, %v2222
  %v2224 = vpop.f32.mrb[0].mxu0
  %2225 = vmatprep.mubr.f32.mxu0 0.0
  %2226 = vmatmul.mubr.f32.gmra.mrb[0].mxu0 %v1848
  %v2227 = vpop.f32.mrb[0].mxu0
  %v2228 = vadd.f32 %v1661, %v2227
  %v2229 = vpop.f32.mrb[0].mxu0
  %2230 = vmatprep.mubr.f32.mxu0 0.0
  %2231 = vmatmul.mubr.f32.gmra.mrb[0].mxu0 %v1851
  %v2232 = vpop.f32.mrb[0].mxu0
  %v2233 = vadd.f32 %v1661, %v2232
  %v2234 = vpop.f32.mrb[0].mxu0
  %2235 = vmatprep.mubr.f32.mxu0 0.0
  %2236 = vmatmul.mubr.f32.gmra.mrb[0].mxu0 %v1854
  %v2237 = vpop.f32.mrb[0].mxu0
  %v2238 = vadd.f32 %v1661, %v2237
  %v2239 = vpop.f32.mrb[0].mxu0
  %2240 = vdwg.mxu0
  %vm2241 = vcmask 39936
  %2242 = vst.msk [vmem:[%s7] sm:$0xff] %vm2241, %v1923
  %2243 = vst.msk [vmem:[%s7 + $0x8] sm:$0xff] %vm2241, %v1928
  %2244 = vst.msk [vmem:[%s7 + $0x10] sm:$0xff] %vm2241, %v1933
  %2245 = vst.msk [vmem:[%s7 + $0x18] sm:$0xff] %vm2241, %v1938
  %2246 = vst.msk [vmem:[%s7 + $0x20] sm:$0xff] %vm2241, %v1943
  %2247 = vst.msk [vmem:[%s7 + $0x28] sm:$0xff] %vm2241, %v1948
  %2248 = vst.msk [vmem:[%s7 + $0x30] sm:$0xff] %vm2241, %v1953
  %2249 = vst.msk [vmem:[%s7 + $0x38] sm:$0xff] %vm2241, %v1958
  %2250 = vst.msk [vmem:[%s7 + $0x40] sm:$0xff] %vm2241, %v1963
  %2251 = vst.msk [vmem:[%s7 + $0x48] sm:$0xff] %vm2241, %v1968
  %2252 = vst.msk [vmem:[%s7 + $0x50] sm:$0xff] %vm2241, %v1973
  %2253 = vst.msk [vmem:[%s7 + $0x58] sm:$0xff] %vm2241, %v1978
  %2254 = vst.msk [vmem:[%s7 + $0x60] sm:$0xff] %vm2241, %v1983
  %2255 = vst.msk [vmem:[%s7 + $0x68] sm:$0xff] %vm2241, %v1988
  %2256 = vst.msk [vmem:[%s7 + $0x70] sm:$0xff] %vm2241, %v1993
  %2257 = vst.msk [vmem:[%s7 + $0x78] sm:$0xff] %vm2241, %v1998
  %2258 = vst.msk [vmem:[%s7 + $0x80] sm:$0xff] %vm2241, %v2003
  %2259 = vst.msk [vmem:[%s7 + $0x88] sm:$0xff] %vm2241, %v2008
  %2260 = vst.msk [vmem:[%s7 + $0x90] sm:$0xff] %vm2241, %v2013
  %2261 = vst.msk [vmem:[%s7 + $0x98] sm:$0xff] %vm2241, %v2018
  %2262 = vst.msk [vmem:[%s7 + $0xa0] sm:$0xff] %vm2241, %v2023
  %2263 = vst.msk [vmem:[%s7 + $0xa8] sm:$0xff] %vm2241, %v2028
  %2264 = vst.msk [vmem:[%s7 + $0xb0] sm:$0xff] %vm2241, %v2033
  %2265 = vst.msk [vmem:[%s7 + $0xb8] sm:$0xff] %vm2241, %v2038
  %2266 = vst.msk [vmem:[%s7 + $0xc0] sm:$0xff] %vm2241, %v2043
  %2267 = vst.msk [vmem:[%s7 + $0xc8] sm:$0xff] %vm2241, %v2048
  %2268 = vst.msk [vmem:[%s7 + $0xd0] sm:$0xff] %vm2241, %v2053
  %2269 = vst.msk [vmem:[%s7 + $0xd8] sm:$0xff] %vm2241, %v2058
  %2270 = vst.msk [vmem:[%s7 + $0xe0] sm:$0xff] %vm2241, %v2063
  %2271 = vst.msk [vmem:[%s7 + $0xe8] sm:$0xff] %vm2241, %v2068
  %2272 = vst.msk [vmem:[%s7 + $0xf0] sm:$0xff] %vm2241, %v2073
  %2273 = vst.msk [vmem:[%s7 + $0xf8] sm:$0xff] %vm2241, %v2078
  %2274 = vst.msk [vmem:[%s7 + $0x100] sm:$0xff] %vm2241, %v2083
  %2275 = vst.msk [vmem:[%s7 + $0x108] sm:$0xff] %vm2241, %v2088
  %2276 = vst.msk [vmem:[%s7 + $0x110] sm:$0xff] %vm2241, %v2093
  %2277 = vst.msk [vmem:[%s7 + $0x118] sm:$0xff] %vm2241, %v2098
  %2278 = vst.msk [vmem:[%s7 + $0x120] sm:$0xff] %vm2241, %v2103
  %2279 = vst.msk [vmem:[%s7 + $0x128] sm:$0xff] %vm2241, %v2108
  %2280 = vst.msk [vmem:[%s7 + $0x130] sm:$0xff] %vm2241, %v2113
  %2281 = vst.msk [vmem:[%s7 + $0x138] sm:$0xff] %vm2241, %v2118
  %2282 = vst.msk [vmem:[%s7 + $0x140] sm:$0xff] %vm2241, %v2123
  %2283 = vst.msk [vmem:[%s7 + $0x148] sm:$0xff] %vm2241, %v2128
  %2284 = vst.msk [vmem:[%s7 + $0x150] sm:$0xff] %vm2241, %v2133
  %2285 = vst.msk [vmem:[%s7 + $0x158] sm:$0xff] %vm2241, %v2138
  %2286 = vst.msk [vmem:[%s7 + $0x160] sm:$0xff] %vm2241, %v2143
  %2287 = vst.msk [vmem:[%s7 + $0x168] sm:$0xff] %vm2241, %v2148
  %2288 = vst.msk [vmem:[%s7 + $0x170] sm:$0xff] %vm2241, %v2153
  %2289 = vst.msk [vmem:[%s7 + $0x178] sm:$0xff] %vm2241, %v2158
  %2290 = vst.msk [vmem:[%s7 + $0x180] sm:$0xff] %vm2241, %v2163
  %2291 = vst.msk [vmem:[%s7 + $0x188] sm:$0xff] %vm2241, %v2168
  %2292 = vst.msk [vmem:[%s7 + $0x190] sm:$0xff] %vm2241, %v2173
  %2293 = vst.msk [vmem:[%s7 + $0x198] sm:$0xff] %vm2241, %v2178
  %2294 = vst.msk [vmem:[%s7 + $0x1a0] sm:$0xff] %vm2241, %v2183
  %2295 = vst.msk [vmem:[%s7 + $0x1a8] sm:$0xff] %vm2241, %v2188
  %2296 = vst.msk [vmem:[%s7 + $0x1b0] sm:$0xff] %vm2241, %v2193
  %2297 = vst.msk [vmem:[%s7 + $0x1b8] sm:$0xff] %vm2241, %v2198
  %2298 = vst.msk [vmem:[%s7 + $0x1c0] sm:$0xff] %vm2241, %v2203
  %2299 = vst.msk [vmem:[%s7 + $0x1c8] sm:$0xff] %vm2241, %v2208
  %2300 = vst.msk [vmem:[%s7 + $0x1d0] sm:$0xff] %vm2241, %v2213
  %2301 = vst.msk [vmem:[%s7 + $0x1d8] sm:$0xff] %vm2241, %v2218
  %2302 = vst.msk [vmem:[%s7 + $0x1e0] sm:$0xff] %vm2241, %v2223
  %2303 = vst.msk [vmem:[%s7 + $0x1e8] sm:$0xff] %vm2241, %v2228
  %2304 = vst.msk [vmem:[%s7 + $0x1f0] sm:$0xff] %vm2241, %v2233
  %2305 = vst.msk [vmem:[%s7 + $0x1f8] sm:$0xff] %vm2241, %v2238
  // Predicated region
  $region30: #{pointwise_regressor.1} parent=0 // pred_check
    _
  $region31: #{pointwise_regressor.1} parent=0 // pred_check_branch
    %2307 = sbr.rel (0) target = $region33
  $region32: #{pointwise_regressor.1} parent=0 // pred_region
    _
  $region33: #{pointwise_regressor.1} parent=0 // pred_fallthru
    _
  // Predicated region
  $region34: #{pointwise_regressor.1} parent=0 // pred_check
    _
  $region35: #{pointwise_regressor.1} parent=0 // pred_check_branch
    %2309 = sbr.rel (0) target = $region37
  $region36: #{pointwise_regressor.1} parent=0 // pred_region
    _
  $region37: #{pointwise_regressor.1} parent=0 // pred_fallthru
    _

</llo_original>
